<compile_context>
chip_gen: v5e
topology: v5e:2x2
jax: 0.10.0
libtpu: 0.0.40
codegen_flags: <defaults>
</compile_context>

<pallas_src>
import functools

import jax
import jax.numpy as jnp
from jax.experimental import pallas as pl
from jax.experimental.pallas import tpu as pltpu

EPS = 1e-7          # self.eps = 1e-07 set at the end of __init__
LEAKY_SLOPE = 0.2
OUT_W = 128         # lane-dense output slab width

_VMEM = pl.BlockSpec(memory_space=pltpu.MemorySpace.VMEM)


def _round8(n):
    return ((n + 7) // 8) * 8


def _slab_layout(h_dim, h2, tp2, inp_size, num_discs, num_gens):
    """Row layout of the single packed parameter slab.

    Every tensor starts at an 8-row-aligned offset and at lane 0, so all
    in-kernel carves are cheap static slices.  Returns (layout, rows, width)
    where layout[name] = (row_offset, (rows, cols)).
    """
    del num_gens
    hw = num_discs * h2 + h2                      # stacked hidden width
    shapes = [
        ("whh",     (h_dim, 4 * h_dim)),          # fused recurrent gate weights
        ("w_in",    (inp_size, 4 * h_dim)),       # emb_w @ wih_cat (folded embedding)
        ("b_in",    (1, 4 * h_dim)),              # emb_b @ wih_cat + lstm bias
        ("infc_w1", (h_dim, h2)),
        ("infc_b1", (1, h2)),
        ("infc_w2", (h2, h2)),
        ("infc_b2", (1, h2)),
        ("pe_w1",   (tp2, h_dim)),
        ("pe_b1",   (1, h_dim)),
        ("pe_w2",   (h_dim, h2)),
        ("pe_b2",   (1, h2)),
        ("w1s_top", (h2, hw)),                    # fed by in_enc  (enc rows 0:h2)
        ("w1s_bot", (h_dim - h2, hw)),            # fed by pred_enc (enc rows h2:h)
        ("b1s",     (1, hw)),
        ("w2s",     (hw, OUT_W)),                 # block-diag + gid cols, pre-padded
        ("b2s",     (1, OUT_W)),
    ]
    layout, off, maxc = {}, 0, 0
    for name, shp in shapes:
        layout[name] = (off, shp)
        off += _round8(shp[0])
        maxc = max(maxc, shp[1])
    width = ((maxc + 127) // 128) * 128
    return layout, off, width


# ----------------------------------------------------------------------------
# The single fused forward kernel.
# ----------------------------------------------------------------------------
def _fused_forward_kernel(
    obs_ref, pred_ref, slab_ref, out_ref,
    *, layout, h_dim, n_samples, num_discs, num_gens):
    f32 = jnp.float32
    T, BP, inp = obs_ref.shape          # obs batch is sublane-padded to BP
    NP = pred_ref.shape[0]              # n_samples * BP (padded rows = garbage)
    H = h_dim
    D, G = num_discs, num_gens

    def pick(name):                     # static carve from the packed slab
        off, (r, c) = layout[name]
        return slab_ref[off:off + r, 0:c]

    def leaky(v):
        return jnp.where(v >= 0, v, LEAKY_SLOPE * v)

    def dot(a, w):
        return jnp.dot(a, w, preferred_element_type=f32)

    # ---- TrajectoryEncoder: embedding folded into one input->gate matmul ----
    x = obs_ref[...].astype(f32).reshape(T * BP, inp)
    gih = dot(x, pick("w_in")) + pick("b_in")              # (T*BP, 4H)
    whh = pick("whh")                                      # (H, 4H)

    h = jnp.zeros((BP, H), f32)
    c = jnp.zeros((BP, H), f32)
    for t in range(T):                  # only the true serial recurrence left
        g = gih[t * BP:(t + 1) * BP] + dot(h, whh)         # one (BP,H)@(H,4H)
        i_g = jax.nn.sigmoid(g[:, 0:H])
        f_g = jax.nn.sigmoid(g[:, H:2 * H])
        g_g = jnp.tanh(g[:, 2 * H:3 * H])
        o_g = jax.nn.sigmoid(g[:, 3 * H:4 * H])
        c = f_g * c + i_g * g_g
        h = o_g * jnp.tanh(c)

    # ---- in_encoder_fc: Linear -> LeakyReLU -> Linear ----
    t1 = leaky(dot(h, pick("infc_w1")) + pick("infc_b1"))
    in_enc = dot(t1, pick("infc_w2")) + pick("infc_b2")    # (BP, h/2)
    # Sublane-aligned repeat over samples (whole padded 8-row block tiled).
    in_rep = jnp.tile(in_enc, (n_samples, 1))              # (NP, h/2)

    # ---- pred_encoder: single K=Tp*2 contraction on lane-dense input ----
    ph = leaky(dot(pred_ref[...], pick("pe_w1")) + pick("pe_b1"))   # (NP, H)
    pred_enc = dot(ph, pick("pe_w2")) + pick("pe_b2")               # (NP, h/2)

    # ---- all disc heads + gen_id_reconstructor, no enc lane-concat ----
    hid = leaky(dot(in_rep, pick("w1s_top")) + dot(pred_enc, pick("w1s_bot"))
                + pick("b1s"))                                      # (NP, D*h2+h2)
    out2 = dot(hid, pick("w2s")) + pick("b2s")                      # (NP, OUT_W)
    # Column map of out2: [0]=unused, [1:1+G]=branch logits, [1+G:1+G+D]=disc.

    disc = jax.nn.sigmoid(out2[:, 1 + G:1 + G + D]) * (1.0 - 2.0 * EPS) + EPS
    mean_disc = jnp.mean(disc, axis=1, keepdims=True)               # (NP, 1)

    lane = jax.lax.broadcasted_iota(jnp.int32, out_ref.shape, 1)
    out_ref[...] = jnp.where(lane == 0, mean_disc, out2)


# ----------------------------------------------------------------------------
# Parameters: per-head "torch-like" params + one-time kernel-layout preparation
# ----------------------------------------------------------------------------
def init_params(key, h_dim, pred_len, inp_size, num_discs, num_gens):
    h2 = h_dim // 2
    keys = iter(jax.random.split(key, 32))

    def nrm(shape, scale=0.1):
        return (scale * jax.random.normal(next(keys), shape)).astype(jnp.float32)

    p = {}
    # TrajectoryEncoder: embedding Linear(inp_size, h_dim) + LSTM(h_dim, h_dim)
    # LSTM weights stored gate-major: axis 0 = (i, f, g, o).
    p["emb_w"] = nrm((inp_size, h_dim))
    p["emb_b"] = nrm((1, h_dim))
    p["lstm_wih"] = nrm((4, h_dim, h_dim))
    p["lstm_whh"] = nrm((4, h_dim, h_dim))
    p["lstm_b"] = nrm((4, 1, h_dim))           # bias_ih + bias_hh combined
    # in_encoder_fc: Linear(h, h/2) -> LeakyReLU -> Linear(h/2, h/2)
    p["infc_w1"] = nrm((h_dim, h2)); p["infc_b1"] = nrm((1, h2))
    p["infc_w2"] = nrm((h2, h2));    p["infc_b2"] = nrm((1, h2))
    # pred_encoder: Linear(pred_len*inp, h) -> LeakyReLU -> Linear(h, h/2)
    p["pe_w1"] = nrm((pred_len * inp_size, h_dim)); p["pe_b1"] = nrm((1, h_dim))
    p["pe_w2"] = nrm((h_dim, h2));                  p["pe_b2"] = nrm((1, h2))
    # num_discs discriminator heads (per-head, torch-like)
    p["d_w1"] = nrm((num_discs, h_dim, h2)); p["d_b1"] = nrm((num_discs, 1, h2))
    p["d_w2"] = nrm((num_discs, h2, 1));     p["d_b2"] = nrm((num_discs, 1, 1))
    # mgan gen_id_reconstructor: Linear(h, h/2) -> LeakyReLU -> Linear(h/2, G)
    p["gid_w1"] = nrm((h_dim, h2));    p["gid_b1"] = nrm((1, h2))
    p["gid_w2"] = nrm((h2, num_gens)); p["gid_b2"] = nrm((1, num_gens))
    return p


def prepare_params(p, num_discs, num_gens, pred_len, inp_size):
    """One-time transform of per-head params into ONE packed lane-dense slab."""
    D, G = num_discs, num_gens
    h_dim = p["lstm_whh"].shape[1]
    h2 = h_dim // 2
    tp2 = pred_len * inp_size
    assert 1 + G + D <= OUT_W, "output slab too narrow for num_gens/num_discs"
    hdot = functools.partial(jnp.dot, precision=jax.lax.Precision.HIGHEST)

    # Fused-gate layouts: lanes [0:H]=i, [H:2H]=f, [2H:3H]=g, [3H:4H]=o.
    wih_cat = jnp.concatenate([p["lstm_wih"][k] for k in range(4)], axis=1)
    whh_cat = jnp.concatenate([p["lstm_whh"][k] for k in range(4)], axis=1)
    b_cat = jnp.concatenate([p["lstm_b"][k] for k in range(4)], axis=1)
    w_in = hdot(p["emb_w"], wih_cat)                       # embedding folded in
    b_in = hdot(p["emb_b"], wih_cat) + b_cat

    # Stacked first layers: discs then gen_id_reconstructor, split row-wise.
    w1s = jnp.concatenate([p["d_w1"][d] for d in range(D)] + [p["gid_w1"]], axis=1)
    b1s = jnp.concatenate([p["d_b1"][d] for d in range(D)] + [p["gid_b1"]], axis=1)
    w1s_top, w1s_bot = w1s[:h2], w1s[h2:]

    # Second layer pre-padded to OUT_W lanes:
    #   col 0 unused, cols 1:1+G = gid, cols 1+G:1+G+D = per-disc block-diag.
    hw = D * h2 + h2
    w2s = jnp.zeros((hw, OUT_W), jnp.float32)
    w2s = w2s.at[D * h2:, 1:1 + G].set(p["gid_w2"])
    for d in range(D):
        w2s = w2s.at[d * h2:(d + 1) * h2, 1 + G + d].set(p["d_w2"][d][:, 0])
    b2s = jnp.zeros((1, OUT_W), jnp.float32)
    b2s = b2s.at[:, 1:1 + G].set(p["gid_b2"])
    for d in range(D):
        b2s = b2s.at[:, 1 + G + d].set(p["d_b2"][d][:, 0])

    tensors = {
        "whh": whh_cat, "w_in": w_in, "b_in": b_in,
        "infc_w1": p["infc_w1"], "infc_b1": p["infc_b1"],
        "infc_w2": p["infc_w2"], "infc_b2": p["infc_b2"],
        "pe_w1": p["pe_w1"], "pe_b1": p["pe_b1"],
        "pe_w2": p["pe_w2"], "pe_b2": p["pe_b2"],
        "w1s_top": w1s_top, "w1s_bot": w1s_bot, "b1s": b1s,
        "w2s": w2s, "b2s": b2s,
    }
    layout, rows, width = _slab_layout(h_dim, h2, tp2, inp_size, D, G)
    slab = jnp.zeros((rows, width), jnp.float32)
    for name, (off, shp) in layout.items():
        t = tensors[name]
        assert t.shape == shp, (name, t.shape, shp)
        slab = slab.at[off:off + shp[0], :shp[1]].set(t)

    return {"slab": slab, "layout": layout, "h_dim": h_dim,
            "num_discs": D, "num_gens": G}


# ----------------------------------------------------------------------------
# Forward pass: one pallas_call (3 input DMAs) + trivial slicing of the slab.
# ----------------------------------------------------------------------------
def forward(kp, in_xy, in_dxdy, pred_xy, pred_dxdy, seq_start_end,
            return_all=False, img=None, mask=None):
    # inp_format='rel' -> only displacements used; global_disc=False, scene_dim=0.
    del in_xy, seq_start_end, img, mask, return_all
    if pred_dxdy.ndim == 3:
        pred_xy = pred_xy[:, None]
        pred_dxdy = pred_dxdy[:, None]
    Tp, n_samples, b, d_xy = pred_dxdy.shape
    D = kp["num_discs"]
    G = kp["num_gens"]
    assert 1 + G + D <= OUT_W, "output slab too narrow for num_gens/num_discs"

    # Sublane-pad the batch axis to a multiple of 8 everywhere (obs, pred,
    # output rows).  Padded rows are finite garbage, sliced off below.
    BP = max(8, ((b + 7) // 8) * 8)
    NP = n_samples * BP
    obs = in_dxdy
    if BP != b:
        obs = jnp.pad(in_dxdy, ((0, 0), (0, BP - b), (0, 0)))

    # Lane-dense pred slab: (Tp,n,b,2) -> (n,BP,Tp*2), (t, xy) minor order
    # matching torch's permute(1,2,0,3).reshape(n*b, -1).
    pred_p = jnp.transpose(pred_dxdy, (1, 2, 0, 3))
    if BP != b:
        pred_p = jnp.pad(pred_p, ((0, 0), (0, BP - b), (0, 0), (0, 0)))
    pred_p = pred_p.reshape(NP, Tp * d_xy)

    kernel = functools.partial(
        _fused_forward_kernel, layout=kp["layout"], h_dim=kp["h_dim"],
        n_samples=n_samples, num_discs=D, num_gens=G)

    slab = pl.pallas_call(
        kernel,
        out_shape=jax.ShapeDtypeStruct((NP, OUT_W), jnp.float32),
        in_specs=[_VMEM, _VMEM, _VMEM],
        out_specs=_VMEM,
    )(obs, pred_p, kp["slab"])

    slab = slab.reshape(n_samples, BP, OUT_W)[:, :b, :]     # drop padded rows
    output = slab[:, :, 0].T                                # (b, n)
    branch = jnp.transpose(slab[:, :, 1:1 + G], (1, 0, 2))  # (b, n, G)
    return output, branch


# ----------------------------------------------------------------------------
# Pure-JAX reference (per-head math, HIGHEST matmul precision) for correctness
# ----------------------------------------------------------------------------
def reference_forward(p, in_dxdy, pred_dxdy):
    dot = functools.partial(jnp.dot, precision=jax.lax.Precision.HIGHEST)
    T, b, _ = in_dxdy.shape
    Tp, n, _, d_xy = pred_dxdy.shape
    H = p["lstm_whh"].shape[1]

    emb = dot(in_dxdy.reshape(T * b, -1), p["emb_w"]) + p["emb_b"]
    emb = emb.reshape(T, b, -1)
    h = jnp.zeros((b, H), jnp.float32)
    c = jnp.zeros((b, H), jnp.float32)
    for t in range(T):
        i = jax.nn.sigmoid(dot(emb[t], p["lstm_wih"][0]) + dot(h, p["lstm_whh"][0]) + p["lstm_b"][0])
        f = jax.nn.sigmoid(dot(emb[t], p["lstm_wih"][1]) + dot(h, p["lstm_whh"][1]) + p["lstm_b"][1])
        g = jnp.tanh(dot(emb[t], p["lstm_wih"][2]) + dot(h, p["lstm_whh"][2]) + p["lstm_b"][2])
        o = jax.nn.sigmoid(dot(emb[t], p["lstm_wih"][3]) + dot(h, p["lstm_whh"][3]) + p["lstm_b"][3])
        c = f * c + i * g
        h = o * jnp.tanh(c)

    leaky = lambda v: jnp.where(v >= 0, v, LEAKY_SLOPE * v)
    mlp = lambda v, w1, b1, w2, b2: dot(leaky(dot(v, w1) + b1), w2) + b2

    in_enc = mlp(h, p["infc_w1"], p["infc_b1"], p["infc_w2"], p["infc_b2"])
    pred_inp = jnp.transpose(pred_dxdy, (1, 2, 0, 3)).reshape(n * b, -1)
    pred_enc = mlp(pred_inp, p["pe_w1"], p["pe_b1"], p["pe_w2"], p["pe_b2"])
    enc = jnp.concatenate([jnp.tile(in_enc, (n, 1)), pred_enc], axis=1)

    ys = [jax.nn.sigmoid(mlp(enc, p["d_w1"][d], p["d_b1"][d],
                             p["d_w2"][d], p["d_b2"][d]))
          for d in range(p["d_w1"].shape[0])]
    out = jnp.concatenate(ys, axis=1)
    out = out * (1.0 - 2.0 * EPS) + EPS
    out = out.mean(1).reshape(n, b).T

    branch = mlp(enc, p["gid_w1"], p["gid_b1"], p["gid_w2"], p["gid_b2"])
    branch = jnp.swapaxes(branch.reshape(n, b, -1), 0, 1)
    return out, branch


# ----------------------------------------------------------------------------
if __name__ == "__main__":
    h_dim, obs_len, pred_len = 32, 8, 8
    batch, n_samples = 4, 2
    num_discs, num_gens = 3, 4
    inp_size = 2  # inp_format='rel'

    key = jax.random.PRNGKey(0)
    kparam, k1, k2, k3, k4 = jax.random.split(key, 5)
    params = init_params(kparam, h_dim, pred_len, inp_size, num_discs, num_gens)
    kparams = prepare_params(params, num_discs, num_gens, pred_len, inp_size)

    in_xy = jax.random.normal(k1, (obs_len, batch, 2), jnp.float32)
    in_dxdy = jax.random.normal(k2, (obs_len, batch, 2), jnp.float32)
    pred_xy = jax.random.normal(k3, (pred_len, n_samples, batch, 2), jnp.float32)
    pred_dxdy = jax.random.normal(k4, (pred_len, n_samples, batch, 2), jnp.float32)
    seq_start_end = jnp.array([[0, batch]], jnp.int32)

    out, branch = forward(kparams, in_xy, in_dxdy, pred_xy, pred_dxdy,
                          seq_start_end)
    out, branch = jax.block_until_ready((out, branch))

    ref_out, ref_branch = reference_forward(params, in_dxdy, pred_dxdy)

    assert out.shape == (batch, n_samples), out.shape
    assert branch.shape == (batch, n_samples, num_gens), branch.shape
    assert jnp.allclose(out, ref_out, rtol=2e-3, atol=2e-3)
    assert jnp.allclose(branch, ref_branch, rtol=2e-3, atol=2e-3)

    print("KERNEL_OK")
</pallas_src>

<mosaic_0001>
module attributes {stable_mosaic.version = 11 : i64} {
  func.func @_fused_forward_kernel(%arg0: memref<8x8x2xf32, #tpu.memory_space<vmem>>, %arg1: memref<16x16xf32, #tpu.memory_space<vmem>>, %arg2: memref<288x128xf32, #tpu.memory_space<vmem>>, %arg3: memref<16x128xf32, #tpu.memory_space<vmem>>) attributes {dimension_semantics = [], scalar_prefetch = 0 : i64, scratch_operands = 0 : i64, tpu.core_type = #tpu.core_type<tc>} {
    %c0 = arith.constant 0 : index
    %c0_0 = arith.constant 0 : index
    %c0_1 = arith.constant 0 : index
    %0 = vector.load %arg0[%c0, %c0_0, %c0_1] : memref<8x8x2xf32, #tpu.memory_space<vmem>>, vector<8x8x2xf32>
    %1 = vector.shape_cast %0 : vector<8x8x2xf32> to vector<64x2xf32>
    %c32 = arith.constant 32 : index
    %c0_2 = arith.constant 0 : index
    %2 = vector.load %arg2[%c32, %c0_2] : memref<288x128xf32, #tpu.memory_space<vmem>>, vector<2x128xf32>
    %cst = arith.constant dense<0.000000e+00> : vector<64x128xf32>
    %3 = tpu.matmul %1, %2, %cst {dimension_numbers = #tpu.dot_dimension_numbers<[1], [0], [0], [1], [0, 0, 1, 1], [], []>} : vector<64x2xf32>, vector<2x128xf32>, vector<64x128xf32> -> vector<64x128xf32>
    %c40 = arith.constant 40 : index
    %c0_3 = arith.constant 0 : index
    %4 = vector.load %arg2[%c40, %c0_3] : memref<288x128xf32, #tpu.memory_space<vmem>>, vector<1x128xf32>
    %5 = vector.broadcast %4 : vector<1x128xf32> to vector<64x128xf32>
    %6 = arith.addf %3, %5 : vector<64x128xf32>
    %c0_4 = arith.constant 0 : index
    %c0_5 = arith.constant 0 : index
    %7 = vector.load %arg2[%c0_4, %c0_5] : memref<288x128xf32, #tpu.memory_space<vmem>>, vector<32x128xf32>
    %cst_6 = arith.constant 0.000000e+00 : f32
    %8 = vector.broadcast %cst_6 : f32 to vector<8x32xf32>
    %cst_7 = arith.constant 0.000000e+00 : f32
    %9 = vector.broadcast %cst_7 : f32 to vector<8x32xf32>
    %10 = vector.extract_strided_slice %6 {offsets = [0, 0], sizes = [8, 128], strides = [1, 1]} : vector<64x128xf32> to vector<8x128xf32>
    %cst_8 = arith.constant dense<0.000000e+00> : vector<8x128xf32>
    %11 = tpu.matmul %8, %7, %cst_8 {dimension_numbers = #tpu.dot_dimension_numbers<[1], [0], [0], [1], [0, 0, 1, 1], [], []>} : vector<8x32xf32>, vector<32x128xf32>, vector<8x128xf32> -> vector<8x128xf32>
    %12 = arith.addf %10, %11 : vector<8x128xf32>
    %13 = vector.extract_strided_slice %12 {offsets = [0, 0], sizes = [8, 32], strides = [1, 1]} : vector<8x128xf32> to vector<8x32xf32>
    %14 = arith.negf %13 : vector<8x32xf32>
    %15 = math.exp %14 : vector<8x32xf32>
    %cst_9 = arith.constant 1.000000e+00 : f32
    %16 = vector.broadcast %cst_9 : f32 to vector<8x32xf32>
    %17 = arith.addf %16, %15 : vector<8x32xf32>
    %18 = arith.divf %16, %17 : vector<8x32xf32>
    %19 = vector.extract_strided_slice %12 {offsets = [0, 32], sizes = [8, 32], strides = [1, 1]} : vector<8x128xf32> to vector<8x32xf32>
    %20 = arith.negf %19 : vector<8x32xf32>
    %21 = math.exp %20 : vector<8x32xf32>
    %cst_10 = arith.constant 1.000000e+00 : f32
    %22 = vector.broadcast %cst_10 : f32 to vector<8x32xf32>
    %23 = arith.addf %22, %21 : vector<8x32xf32>
    %24 = arith.divf %22, %23 : vector<8x32xf32>
    %25 = vector.extract_strided_slice %12 {offsets = [0, 64], sizes = [8, 32], strides = [1, 1]} : vector<8x128xf32> to vector<8x32xf32>
    %26 = math.tanh %25 : vector<8x32xf32>
    %27 = vector.extract_strided_slice %12 {offsets = [0, 96], sizes = [8, 32], strides = [1, 1]} : vector<8x128xf32> to vector<8x32xf32>
    %28 = arith.negf %27 : vector<8x32xf32>
    %29 = math.exp %28 : vector<8x32xf32>
    %cst_11 = arith.constant 1.000000e+00 : f32
    %30 = vector.broadcast %cst_11 : f32 to vector<8x32xf32>
    %31 = arith.addf %30, %29 : vector<8x32xf32>
    %32 = arith.divf %30, %31 : vector<8x32xf32>
    %33 = arith.mulf %24, %9 : vector<8x32xf32>
    %34 = arith.mulf %18, %26 : vector<8x32xf32>
    %35 = arith.addf %33, %34 : vector<8x32xf32>
    %36 = math.tanh %35 : vector<8x32xf32>
    %37 = arith.mulf %32, %36 : vector<8x32xf32>
    %38 = vector.extract_strided_slice %6 {offsets = [8, 0], sizes = [8, 128], strides = [1, 1]} : vector<64x128xf32> to vector<8x128xf32>
    %cst_12 = arith.constant dense<0.000000e+00> : vector<8x128xf32>
    %39 = tpu.matmul %37, %7, %cst_12 {dimension_numbers = #tpu.dot_dimension_numbers<[1], [0], [0], [1], [0, 0, 1, 1], [], []>} : vector<8x32xf32>, vector<32x128xf32>, vector<8x128xf32> -> vector<8x128xf32>
    %40 = arith.addf %38, %39 : vector<8x128xf32>
    %41 = vector.extract_strided_slice %40 {offsets = [0, 0], sizes = [8, 32], strides = [1, 1]} : vector<8x128xf32> to vector<8x32xf32>
    %42 = arith.negf %41 : vector<8x32xf32>
    %43 = math.exp %42 : vector<8x32xf32>
    %cst_13 = arith.constant 1.000000e+00 : f32
    %44 = vector.broadcast %cst_13 : f32 to vector<8x32xf32>
    %45 = arith.addf %44, %43 : vector<8x32xf32>
    %46 = arith.divf %44, %45 : vector<8x32xf32>
    %47 = vector.extract_strided_slice %40 {offsets = [0, 32], sizes = [8, 32], strides = [1, 1]} : vector<8x128xf32> to vector<8x32xf32>
    %48 = arith.negf %47 : vector<8x32xf32>
    %49 = math.exp %48 : vector<8x32xf32>
    %cst_14 = arith.constant 1.000000e+00 : f32
    %50 = vector.broadcast %cst_14 : f32 to vector<8x32xf32>
    %51 = arith.addf %50, %49 : vector<8x32xf32>
    %52 = arith.divf %50, %51 : vector<8x32xf32>
    %53 = vector.extract_strided_slice %40 {offsets = [0, 64], sizes = [8, 32], strides = [1, 1]} : vector<8x128xf32> to vector<8x32xf32>
    %54 = math.tanh %53 : vector<8x32xf32>
    %55 = vector.extract_strided_slice %40 {offsets = [0, 96], sizes = [8, 32], strides = [1, 1]} : vector<8x128xf32> to vector<8x32xf32>
    %56 = arith.negf %55 : vector<8x32xf32>
    %57 = math.exp %56 : vector<8x32xf32>
    %cst_15 = arith.constant 1.000000e+00 : f32
    %58 = vector.broadcast %cst_15 : f32 to vector<8x32xf32>
    %59 = arith.addf %58, %57 : vector<8x32xf32>
    %60 = arith.divf %58, %59 : vector<8x32xf32>
    %61 = arith.mulf %52, %35 : vector<8x32xf32>
    %62 = arith.mulf %46, %54 : vector<8x32xf32>
    %63 = arith.addf %61, %62 : vector<8x32xf32>
    %64 = math.tanh %63 : vector<8x32xf32>
    %65 = arith.mulf %60, %64 : vector<8x32xf32>
    %66 = vector.extract_strided_slice %6 {offsets = [16, 0], sizes = [8, 128], strides = [1, 1]} : vector<64x128xf32> to vector<8x128xf32>
    %cst_16 = arith.constant dense<0.000000e+00> : vector<8x128xf32>
    %67 = tpu.matmul %65, %7, %cst_16 {dimension_numbers = #tpu.dot_dimension_numbers<[1], [0], [0], [1], [0, 0, 1, 1], [], []>} : vector<8x32xf32>, vector<32x128xf32>, vector<8x128xf32> -> vector<8x128xf32>
    %68 = arith.addf %66, %67 : vector<8x128xf32>
    %69 = vector.extract_strided_slice %68 {offsets = [0, 0], sizes = [8, 32], strides = [1, 1]} : vector<8x128xf32> to vector<8x32xf32>
    %70 = arith.negf %69 : vector<8x32xf32>
    %71 = math.exp %70 : vector<8x32xf32>
    %cst_17 = arith.constant 1.000000e+00 : f32
    %72 = vector.broadcast %cst_17 : f32 to vector<8x32xf32>
    %73 = arith.addf %72, %71 : vector<8x32xf32>
    %74 = arith.divf %72, %73 : vector<8x32xf32>
    %75 = vector.extract_strided_slice %68 {offsets = [0, 32], sizes = [8, 32], strides = [1, 1]} : vector<8x128xf32> to vector<8x32xf32>
    %76 = arith.negf %75 : vector<8x32xf32>
    %77 = math.exp %76 : vector<8x32xf32>
    %cst_18 = arith.constant 1.000000e+00 : f32
    %78 = vector.broadcast %cst_18 : f32 to vector<8x32xf32>
    %79 = arith.addf %78, %77 : vector<8x32xf32>
    %80 = arith.divf %78, %79 : vector<8x32xf32>
    %81 = vector.extract_strided_slice %68 {offsets = [0, 64], sizes = [8, 32], strides = [1, 1]} : vector<8x128xf32> to vector<8x32xf32>
    %82 = math.tanh %81 : vector<8x32xf32>
    %83 = vector.extract_strided_slice %68 {offsets = [0, 96], sizes = [8, 32], strides = [1, 1]} : vector<8x128xf32> to vector<8x32xf32>
    %84 = arith.negf %83 : vector<8x32xf32>
    %85 = math.exp %84 : vector<8x32xf32>
    %cst_19 = arith.constant 1.000000e+00 : f32
    %86 = vector.broadcast %cst_19 : f32 to vector<8x32xf32>
    %87 = arith.addf %86, %85 : vector<8x32xf32>
    %88 = arith.divf %86, %87 : vector<8x32xf32>
    %89 = arith.mulf %80, %63 : vector<8x32xf32>
    %90 = arith.mulf %74, %82 : vector<8x32xf32>
    %91 = arith.addf %89, %90 : vector<8x32xf32>
    %92 = math.tanh %91 : vector<8x32xf32>
    %93 = arith.mulf %88, %92 : vector<8x32xf32>
    %94 = vector.extract_strided_slice %6 {offsets = [24, 0], sizes = [8, 128], strides = [1, 1]} : vector<64x128xf32> to vector<8x128xf32>
    %cst_20 = arith.constant dense<0.000000e+00> : vector<8x128xf32>
    %95 = tpu.matmul %93, %7, %cst_20 {dimension_numbers = #tpu.dot_dimension_numbers<[1], [0], [0], [1], [0, 0, 1, 1], [], []>} : vector<8x32xf32>, vector<32x128xf32>, vector<8x128xf32> -> vector<8x128xf32>
    %96 = arith.addf %94, %95 : vector<8x128xf32>
    %97 = vector.extract_strided_slice %96 {offsets = [0, 0], sizes = [8, 32], strides = [1, 1]} : vector<8x128xf32> to vector<8x32xf32>
    %98 = arith.negf %97 : vector<8x32xf32>
    %99 = math.exp %98 : vector<8x32xf32>
    %cst_21 = arith.constant 1.000000e+00 : f32
    %100 = vector.broadcast %cst_21 : f32 to vector<8x32xf32>
    %101 = arith.addf %100, %99 : vector<8x32xf32>
    %102 = arith.divf %100, %101 : vector<8x32xf32>
    %103 = vector.extract_strided_slice %96 {offsets = [0, 32], sizes = [8, 32], strides = [1, 1]} : vector<8x128xf32> to vector<8x32xf32>
    %104 = arith.negf %103 : vector<8x32xf32>
    %105 = math.exp %104 : vector<8x32xf32>
    %cst_22 = arith.constant 1.000000e+00 : f32
    %106 = vector.broadcast %cst_22 : f32 to vector<8x32xf32>
    %107 = arith.addf %106, %105 : vector<8x32xf32>
    %108 = arith.divf %106, %107 : vector<8x32xf32>
    %109 = vector.extract_strided_slice %96 {offsets = [0, 64], sizes = [8, 32], strides = [1, 1]} : vector<8x128xf32> to vector<8x32xf32>
    %110 = math.tanh %109 : vector<8x32xf32>
    %111 = vector.extract_strided_slice %96 {offsets = [0, 96], sizes = [8, 32], strides = [1, 1]} : vector<8x128xf32> to vector<8x32xf32>
    %112 = arith.negf %111 : vector<8x32xf32>
    %113 = math.exp %112 : vector<8x32xf32>
    %cst_23 = arith.constant 1.000000e+00 : f32
    %114 = vector.broadcast %cst_23 : f32 to vector<8x32xf32>
    %115 = arith.addf %114, %113 : vector<8x32xf32>
    %116 = arith.divf %114, %115 : vector<8x32xf32>
    %117 = arith.mulf %108, %91 : vector<8x32xf32>
    %118 = arith.mulf %102, %110 : vector<8x32xf32>
    %119 = arith.addf %117, %118 : vector<8x32xf32>
    %120 = math.tanh %119 : vector<8x32xf32>
    %121 = arith.mulf %116, %120 : vector<8x32xf32>
    %122 = vector.extract_strided_slice %6 {offsets = [32, 0], sizes = [8, 128], strides = [1, 1]} : vector<64x128xf32> to vector<8x128xf32>
    %cst_24 = arith.constant dense<0.000000e+00> : vector<8x128xf32>
    %123 = tpu.matmul %121, %7, %cst_24 {dimension_numbers = #tpu.dot_dimension_numbers<[1], [0], [0], [1], [0, 0, 1, 1], [], []>} : vector<8x32xf32>, vector<32x128xf32>, vector<8x128xf32> -> vector<8x128xf32>
    %124 = arith.addf %122, %123 : vector<8x128xf32>
    %125 = vector.extract_strided_slice %124 {offsets = [0, 0], sizes = [8, 32], strides = [1, 1]} : vector<8x128xf32> to vector<8x32xf32>
    %126 = arith.negf %125 : vector<8x32xf32>
    %127 = math.exp %126 : vector<8x32xf32>
    %cst_25 = arith.constant 1.000000e+00 : f32
    %128 = vector.broadcast %cst_25 : f32 to vector<8x32xf32>
    %129 = arith.addf %128, %127 : vector<8x32xf32>
    %130 = arith.divf %128, %129 : vector<8x32xf32>
    %131 = vector.extract_strided_slice %124 {offsets = [0, 32], sizes = [8, 32], strides = [1, 1]} : vector<8x128xf32> to vector<8x32xf32>
    %132 = arith.negf %131 : vector<8x32xf32>
    %133 = math.exp %132 : vector<8x32xf32>
    %cst_26 = arith.constant 1.000000e+00 : f32
    %134 = vector.broadcast %cst_26 : f32 to vector<8x32xf32>
    %135 = arith.addf %134, %133 : vector<8x32xf32>
    %136 = arith.divf %134, %135 : vector<8x32xf32>
    %137 = vector.extract_strided_slice %124 {offsets = [0, 64], sizes = [8, 32], strides = [1, 1]} : vector<8x128xf32> to vector<8x32xf32>
    %138 = math.tanh %137 : vector<8x32xf32>
    %139 = vector.extract_strided_slice %124 {offsets = [0, 96], sizes = [8, 32], strides = [1, 1]} : vector<8x128xf32> to vector<8x32xf32>
    %140 = arith.negf %139 : vector<8x32xf32>
    %141 = math.exp %140 : vector<8x32xf32>
    %cst_27 = arith.constant 1.000000e+00 : f32
    %142 = vector.broadcast %cst_27 : f32 to vector<8x32xf32>
    %143 = arith.addf %142, %141 : vector<8x32xf32>
    %144 = arith.divf %142, %143 : vector<8x32xf32>
    %145 = arith.mulf %136, %119 : vector<8x32xf32>
    %146 = arith.mulf %130, %138 : vector<8x32xf32>
    %147 = arith.addf %145, %146 : vector<8x32xf32>
    %148 = math.tanh %147 : vector<8x32xf32>
    %149 = arith.mulf %144, %148 : vector<8x32xf32>
    %150 = vector.extract_strided_slice %6 {offsets = [40, 0], sizes = [8, 128], strides = [1, 1]} : vector<64x128xf32> to vector<8x128xf32>
    %cst_28 = arith.constant dense<0.000000e+00> : vector<8x128xf32>
    %151 = tpu.matmul %149, %7, %cst_28 {dimension_numbers = #tpu.dot_dimension_numbers<[1], [0], [0], [1], [0, 0, 1, 1], [], []>} : vector<8x32xf32>, vector<32x128xf32>, vector<8x128xf32> -> vector<8x128xf32>
    %152 = arith.addf %150, %151 : vector<8x128xf32>
    %153 = vector.extract_strided_slice %152 {offsets = [0, 0], sizes = [8, 32], strides = [1, 1]} : vector<8x128xf32> to vector<8x32xf32>
    %154 = arith.negf %153 : vector<8x32xf32>
    %155 = math.exp %154 : vector<8x32xf32>
    %cst_29 = arith.constant 1.000000e+00 : f32
    %156 = vector.broadcast %cst_29 : f32 to vector<8x32xf32>
    %157 = arith.addf %156, %155 : vector<8x32xf32>
    %158 = arith.divf %156, %157 : vector<8x32xf32>
    %159 = vector.extract_strided_slice %152 {offsets = [0, 32], sizes = [8, 32], strides = [1, 1]} : vector<8x128xf32> to vector<8x32xf32>
    %160 = arith.negf %159 : vector<8x32xf32>
    %161 = math.exp %160 : vector<8x32xf32>
    %cst_30 = arith.constant 1.000000e+00 : f32
    %162 = vector.broadcast %cst_30 : f32 to vector<8x32xf32>
    %163 = arith.addf %162, %161 : vector<8x32xf32>
    %164 = arith.divf %162, %163 : vector<8x32xf32>
    %165 = vector.extract_strided_slice %152 {offsets = [0, 64], sizes = [8, 32], strides = [1, 1]} : vector<8x128xf32> to vector<8x32xf32>
    %166 = math.tanh %165 : vector<8x32xf32>
    %167 = vector.extract_strided_slice %152 {offsets = [0, 96], sizes = [8, 32], strides = [1, 1]} : vector<8x128xf32> to vector<8x32xf32>
    %168 = arith.negf %167 : vector<8x32xf32>
    %169 = math.exp %168 : vector<8x32xf32>
    %cst_31 = arith.constant 1.000000e+00 : f32
    %170 = vector.broadcast %cst_31 : f32 to vector<8x32xf32>
    %171 = arith.addf %170, %169 : vector<8x32xf32>
    %172 = arith.divf %170, %171 : vector<8x32xf32>
    %173 = arith.mulf %164, %147 : vector<8x32xf32>
    %174 = arith.mulf %158, %166 : vector<8x32xf32>
    %175 = arith.addf %173, %174 : vector<8x32xf32>
    %176 = math.tanh %175 : vector<8x32xf32>
    %177 = arith.mulf %172, %176 : vector<8x32xf32>
    %178 = vector.extract_strided_slice %6 {offsets = [48, 0], sizes = [8, 128], strides = [1, 1]} : vector<64x128xf32> to vector<8x128xf32>
    %cst_32 = arith.constant dense<0.000000e+00> : vector<8x128xf32>
    %179 = tpu.matmul %177, %7, %cst_32 {dimension_numbers = #tpu.dot_dimension_numbers<[1], [0], [0], [1], [0, 0, 1, 1], [], []>} : vector<8x32xf32>, vector<32x128xf32>, vector<8x128xf32> -> vector<8x128xf32>
    %180 = arith.addf %178, %179 : vector<8x128xf32>
    %181 = vector.extract_strided_slice %180 {offsets = [0, 0], sizes = [8, 32], strides = [1, 1]} : vector<8x128xf32> to vector<8x32xf32>
    %182 = arith.negf %181 : vector<8x32xf32>
    %183 = math.exp %182 : vector<8x32xf32>
    %cst_33 = arith.constant 1.000000e+00 : f32
    %184 = vector.broadcast %cst_33 : f32 to vector<8x32xf32>
    %185 = arith.addf %184, %183 : vector<8x32xf32>
    %186 = arith.divf %184, %185 : vector<8x32xf32>
    %187 = vector.extract_strided_slice %180 {offsets = [0, 32], sizes = [8, 32], strides = [1, 1]} : vector<8x128xf32> to vector<8x32xf32>
    %188 = arith.negf %187 : vector<8x32xf32>
    %189 = math.exp %188 : vector<8x32xf32>
    %cst_34 = arith.constant 1.000000e+00 : f32
    %190 = vector.broadcast %cst_34 : f32 to vector<8x32xf32>
    %191 = arith.addf %190, %189 : vector<8x32xf32>
    %192 = arith.divf %190, %191 : vector<8x32xf32>
    %193 = vector.extract_strided_slice %180 {offsets = [0, 64], sizes = [8, 32], strides = [1, 1]} : vector<8x128xf32> to vector<8x32xf32>
    %194 = math.tanh %193 : vector<8x32xf32>
    %195 = vector.extract_strided_slice %180 {offsets = [0, 96], sizes = [8, 32], strides = [1, 1]} : vector<8x128xf32> to vector<8x32xf32>
    %196 = arith.negf %195 : vector<8x32xf32>
    %197 = math.exp %196 : vector<8x32xf32>
    %cst_35 = arith.constant 1.000000e+00 : f32
    %198 = vector.broadcast %cst_35 : f32 to vector<8x32xf32>
    %199 = arith.addf %198, %197 : vector<8x32xf32>
    %200 = arith.divf %198, %199 : vector<8x32xf32>
    %201 = arith.mulf %192, %175 : vector<8x32xf32>
    %202 = arith.mulf %186, %194 : vector<8x32xf32>
    %203 = arith.addf %201, %202 : vector<8x32xf32>
    %204 = math.tanh %203 : vector<8x32xf32>
    %205 = arith.mulf %200, %204 : vector<8x32xf32>
    %206 = vector.extract_strided_slice %6 {offsets = [56, 0], sizes = [8, 128], strides = [1, 1]} : vector<64x128xf32> to vector<8x128xf32>
    %cst_36 = arith.constant dense<0.000000e+00> : vector<8x128xf32>
    %207 = tpu.matmul %205, %7, %cst_36 {dimension_numbers = #tpu.dot_dimension_numbers<[1], [0], [0], [1], [0, 0, 1, 1], [], []>} : vector<8x32xf32>, vector<32x128xf32>, vector<8x128xf32> -> vector<8x128xf32>
    %208 = arith.addf %206, %207 : vector<8x128xf32>
    %209 = vector.extract_strided_slice %208 {offsets = [0, 0], sizes = [8, 32], strides = [1, 1]} : vector<8x128xf32> to vector<8x32xf32>
    %210 = arith.negf %209 : vector<8x32xf32>
    %211 = math.exp %210 : vector<8x32xf32>
    %cst_37 = arith.constant 1.000000e+00 : f32
    %212 = vector.broadcast %cst_37 : f32 to vector<8x32xf32>
    %213 = arith.addf %212, %211 : vector<8x32xf32>
    %214 = arith.divf %212, %213 : vector<8x32xf32>
    %215 = vector.extract_strided_slice %208 {offsets = [0, 32], sizes = [8, 32], strides = [1, 1]} : vector<8x128xf32> to vector<8x32xf32>
    %216 = arith.negf %215 : vector<8x32xf32>
    %217 = math.exp %216 : vector<8x32xf32>
    %cst_38 = arith.constant 1.000000e+00 : f32
    %218 = vector.broadcast %cst_38 : f32 to vector<8x32xf32>
    %219 = arith.addf %218, %217 : vector<8x32xf32>
    %220 = arith.divf %218, %219 : vector<8x32xf32>
    %221 = vector.extract_strided_slice %208 {offsets = [0, 64], sizes = [8, 32], strides = [1, 1]} : vector<8x128xf32> to vector<8x32xf32>
    %222 = math.tanh %221 : vector<8x32xf32>
    %223 = vector.extract_strided_slice %208 {offsets = [0, 96], sizes = [8, 32], strides = [1, 1]} : vector<8x128xf32> to vector<8x32xf32>
    %224 = arith.negf %223 : vector<8x32xf32>
    %225 = math.exp %224 : vector<8x32xf32>
    %cst_39 = arith.constant 1.000000e+00 : f32
    %226 = vector.broadcast %cst_39 : f32 to vector<8x32xf32>
    %227 = arith.addf %226, %225 : vector<8x32xf32>
    %228 = arith.divf %226, %227 : vector<8x32xf32>
    %229 = arith.mulf %220, %203 : vector<8x32xf32>
    %230 = arith.mulf %214, %222 : vector<8x32xf32>
    %231 = arith.addf %229, %230 : vector<8x32xf32>
    %232 = math.tanh %231 : vector<8x32xf32>
    %233 = arith.mulf %228, %232 : vector<8x32xf32>
    %c48 = arith.constant 48 : index
    %c0_40 = arith.constant 0 : index
    %234 = vector.load %arg2[%c48, %c0_40] : memref<288x128xf32, #tpu.memory_space<vmem>>, vector<32x16xf32>
    %cst_41 = arith.constant dense<0.000000e+00> : vector<8x16xf32>
    %235 = tpu.matmul %233, %234, %cst_41 {dimension_numbers = #tpu.dot_dimension_numbers<[1], [0], [0], [1], [0, 0, 1, 1], [], []>} : vector<8x32xf32>, vector<32x16xf32>, vector<8x16xf32> -> vector<8x16xf32>
    %c80 = arith.constant 80 : index
    %c0_42 = arith.constant 0 : index
    %236 = vector.load %arg2[%c80, %c0_42] : memref<288x128xf32, #tpu.memory_space<vmem>>, vector<1x16xf32>
    %237 = vector.broadcast %236 : vector<1x16xf32> to vector<8x16xf32>
    %238 = arith.addf %235, %237 : vector<8x16xf32>
    %cst_43 = arith.constant 0.000000e+00 : f32
    %239 = vector.broadcast %cst_43 : f32 to vector<8x16xf32>
    %240 = arith.cmpf oge, %238, %239 : vector<8x16xf32>
    %cst_44 = arith.constant 2.000000e-01 : f32
    %241 = vector.broadcast %cst_44 : f32 to vector<8x16xf32>
    %242 = arith.mulf %241, %238 : vector<8x16xf32>
    %243 = arith.select %240, %238, %242 : vector<8x16xi1>, vector<8x16xf32>
    %c88 = arith.constant 88 : index
    %c0_45 = arith.constant 0 : index
    %244 = vector.load %arg2[%c88, %c0_45] : memref<288x128xf32, #tpu.memory_space<vmem>>, vector<16x16xf32>
    %cst_46 = arith.constant dense<0.000000e+00> : vector<8x16xf32>
    %245 = tpu.matmul %243, %244, %cst_46 {dimension_numbers = #tpu.dot_dimension_numbers<[1], [0], [0], [1], [0, 0, 1, 1], [], []>} : vector<8x16xf32>, vector<16x16xf32>, vector<8x16xf32> -> vector<8x16xf32>
    %c104 = arith.constant 104 : index
    %c0_47 = arith.constant 0 : index
    %246 = vector.load %arg2[%c104, %c0_47] : memref<288x128xf32, #tpu.memory_space<vmem>>, vector<1x16xf32>
    %247 = vector.broadcast %246 : vector<1x16xf32> to vector<8x16xf32>
    %248 = arith.addf %245, %247 : vector<8x16xf32>
    %249 = tpu.concatenate %248, %248 in 0 : vector<8x16xf32>, vector<8x16xf32> -> vector<16x16xf32>
    %c0_48 = arith.constant 0 : index
    %c0_49 = arith.constant 0 : index
    %250 = vector.load %arg1[%c0_48, %c0_49] : memref<16x16xf32, #tpu.memory_space<vmem>>, vector<16x16xf32>
    %c112 = arith.constant 112 : index
    %c0_50 = arith.constant 0 : index
    %251 = vector.load %arg2[%c112, %c0_50] : memref<288x128xf32, #tpu.memory_space<vmem>>, vector<16x32xf32>
    %cst_51 = arith.constant dense<0.000000e+00> : vector<16x32xf32>
    %252 = tpu.matmul %250, %251, %cst_51 {dimension_numbers = #tpu.dot_dimension_numbers<[1], [0], [0], [1], [0, 0, 1, 1], [], []>} : vector<16x16xf32>, vector<16x32xf32>, vector<16x32xf32> -> vector<16x32xf32>
    %c128 = arith.constant 128 : index
    %c0_52 = arith.constant 0 : index
    %253 = vector.load %arg2[%c128, %c0_52] : memref<288x128xf32, #tpu.memory_space<vmem>>, vector<1x32xf32>
    %254 = vector.broadcast %253 : vector<1x32xf32> to vector<16x32xf32>
    %255 = arith.addf %252, %254 : vector<16x32xf32>
    %cst_53 = arith.constant 0.000000e+00 : f32
    %256 = vector.broadcast %cst_53 : f32 to vector<16x32xf32>
    %257 = arith.cmpf oge, %255, %256 : vector<16x32xf32>
    %cst_54 = arith.constant 2.000000e-01 : f32
    %258 = vector.broadcast %cst_54 : f32 to vector<16x32xf32>
    %259 = arith.mulf %258, %255 : vector<16x32xf32>
    %260 = arith.select %257, %255, %259 : vector<16x32xi1>, vector<16x32xf32>
    %c136 = arith.constant 136 : index
    %c0_55 = arith.constant 0 : index
    %261 = vector.load %arg2[%c136, %c0_55] : memref<288x128xf32, #tpu.memory_space<vmem>>, vector<32x16xf32>
    %cst_56 = arith.constant dense<0.000000e+00> : vector<16x16xf32>
    %262 = tpu.matmul %260, %261, %cst_56 {dimension_numbers = #tpu.dot_dimension_numbers<[1], [0], [0], [1], [0, 0, 1, 1], [], []>} : vector<16x32xf32>, vector<32x16xf32>, vector<16x16xf32> -> vector<16x16xf32>
    %c168 = arith.constant 168 : index
    %c0_57 = arith.constant 0 : index
    %263 = vector.load %arg2[%c168, %c0_57] : memref<288x128xf32, #tpu.memory_space<vmem>>, vector<1x16xf32>
    %264 = vector.broadcast %263 : vector<1x16xf32> to vector<16x16xf32>
    %265 = arith.addf %262, %264 : vector<16x16xf32>
    %c176 = arith.constant 176 : index
    %c0_58 = arith.constant 0 : index
    %266 = vector.load %arg2[%c176, %c0_58] : memref<288x128xf32, #tpu.memory_space<vmem>>, vector<16x64xf32>
    %cst_59 = arith.constant dense<0.000000e+00> : vector<16x64xf32>
    %267 = tpu.matmul %249, %266, %cst_59 {dimension_numbers = #tpu.dot_dimension_numbers<[1], [0], [0], [1], [0, 0, 1, 1], [], []>} : vector<16x16xf32>, vector<16x64xf32>, vector<16x64xf32> -> vector<16x64xf32>
    %c192 = arith.constant 192 : index
    %c0_60 = arith.constant 0 : index
    %268 = vector.load %arg2[%c192, %c0_60] : memref<288x128xf32, #tpu.memory_space<vmem>>, vector<16x64xf32>
    %cst_61 = arith.constant dense<0.000000e+00> : vector<16x64xf32>
    %269 = tpu.matmul %265, %268, %cst_61 {dimension_numbers = #tpu.dot_dimension_numbers<[1], [0], [0], [1], [0, 0, 1, 1], [], []>} : vector<16x16xf32>, vector<16x64xf32>, vector<16x64xf32> -> vector<16x64xf32>
    %270 = arith.addf %267, %269 : vector<16x64xf32>
    %c208 = arith.constant 208 : index
    %c0_62 = arith.constant 0 : index
    %271 = vector.load %arg2[%c208, %c0_62] : memref<288x128xf32, #tpu.memory_space<vmem>>, vector<1x64xf32>
    %272 = vector.broadcast %271 : vector<1x64xf32> to vector<16x64xf32>
    %273 = arith.addf %270, %272 : vector<16x64xf32>
    %cst_63 = arith.constant 0.000000e+00 : f32
    %274 = vector.broadcast %cst_63 : f32 to vector<16x64xf32>
    %275 = arith.cmpf oge, %273, %274 : vector<16x64xf32>
    %cst_64 = arith.constant 2.000000e-01 : f32
    %276 = vector.broadcast %cst_64 : f32 to vector<16x64xf32>
    %277 = arith.mulf %276, %273 : vector<16x64xf32>
    %278 = arith.select %275, %273, %277 : vector<16x64xi1>, vector<16x64xf32>
    %c216 = arith.constant 216 : index
    %c0_65 = arith.constant 0 : index
    %279 = vector.load %arg2[%c216, %c0_65] : memref<288x128xf32, #tpu.memory_space<vmem>>, vector<64x128xf32>
    %cst_66 = arith.constant dense<0.000000e+00> : vector<16x128xf32>
    %280 = tpu.matmul %278, %279, %cst_66 {dimension_numbers = #tpu.dot_dimension_numbers<[1], [0], [0], [1], [0, 0, 1, 1], [], []>} : vector<16x64xf32>, vector<64x128xf32>, vector<16x128xf32> -> vector<16x128xf32>
    %c280 = arith.constant 280 : index
    %c0_67 = arith.constant 0 : index
    %281 = vector.load %arg2[%c280, %c0_67] : memref<288x128xf32, #tpu.memory_space<vmem>>, vector<1x128xf32>
    %282 = vector.broadcast %281 : vector<1x128xf32> to vector<16x128xf32>
    %283 = arith.addf %280, %282 : vector<16x128xf32>
    %284 = vector.extract_strided_slice %283 {offsets = [0, 5], sizes = [16, 3], strides = [1, 1]} : vector<16x128xf32> to vector<16x3xf32>
    %285 = arith.negf %284 : vector<16x3xf32>
    %286 = math.exp %285 : vector<16x3xf32>
    %cst_68 = arith.constant 1.000000e+00 : f32
    %287 = vector.broadcast %cst_68 : f32 to vector<16x3xf32>
    %288 = arith.addf %287, %286 : vector<16x3xf32>
    %289 = arith.divf %287, %288 : vector<16x3xf32>
    %cst_69 = arith.constant 0.999999821 : f32
    %290 = vector.broadcast %cst_69 : f32 to vector<16x3xf32>
    %291 = arith.mulf %289, %290 : vector<16x3xf32>
    %cst_70 = arith.constant 1.000000e-07 : f32
    %292 = vector.broadcast %cst_70 : f32 to vector<16x3xf32>
    %293 = arith.addf %291, %292 : vector<16x3xf32>
    %cst_71 = arith.constant dense<0.000000e+00> : vector<16xf32>
    %294 = vector.multi_reduction <add>, %293, %cst_71 [1] : vector<16x3xf32> to vector<16xf32>
    %295 = vector.shape_cast %294 : vector<16xf32> to vector<16x1xf32>
    %cst_72 = arith.constant 3.000000e+00 : f32
    %296 = vector.broadcast %cst_72 : f32 to vector<16x1xf32>
    %297 = arith.divf %295, %296 : vector<16x1xf32>
    %298 = tpu.iota {dimensions = array<i32: 1>} : vector<16x128xi32>
    %c0_i32 = arith.constant 0 : i32
    %299 = vector.broadcast %c0_i32 : i32 to vector<16x128xi32>
    %300 = arith.cmpi eq, %298, %299 : vector<16x128xi32>
    %301 = vector.shape_cast %297 : vector<16x1xf32> to vector<16x1xf32>
    %302 = vector.broadcast %301 : vector<16x1xf32> to vector<16x128xf32>
    %303 = arith.select %300, %302, %283 : vector<16x128xi1>, vector<16x128xf32>
    %c0_73 = arith.constant 0 : index
    %c0_74 = arith.constant 0 : index
    %304 = vector.load %arg3[%c0_73, %c0_74] : memref<16x128xf32, #tpu.memory_space<vmem>>, vector<16x128xf32>
    tpu.vector_store %arg3[%c0_73, %c0_74], %303 {strides = array<i32>} : memref<16x128xf32, #tpu.memory_space<vmem>>, vector<16x128xf32>,
    return
  }
}

</mosaic_0001>

<llo_original>
// kernel: tpu_custom_call.1
$region0: #{tpu_custom_call.1}
  #allocation0 [shape = 'u32[]', space=smem, size = 0x4, offset = 0x4, fixed_abs, tag = 'smem constant byte address 0x4 - core index']
  #allocation1 [shape = 'u32[72,128]{1,0:T(1,128)}', space=vmem, size = 0x9000, scoped, tag = 'internal scratch']
  %s0 = inlined_call_operand.vmem [shape: f32[8,8,2], index: 0, kind: input, shape index: {}]
  %s1 = inlined_call_operand.vmem [shape: f32[16,16], index: 1, kind: input, shape index: {}]
  %s2 = inlined_call_operand.hbm [shape: f32[288,128], index: 2, kind: input, shape index: {}]
  %s3 = inlined_call_operand.hbm [shape: f32[16,128], index: 3, kind: output, shape index: {}]
  %s4 = sld [smem:[#allocation0]]
  $region26: #{tpu_custom_call.1} parent=0
    _
  %s6 = ssub.s32 1, %s4
  %s7 = scalar_select 0, %s6, %s4
  $region1: #{tpu_custom_call.1} parent=0
    #allocation2 [shape = 'u8[147456]{0}', space=vmem, size = 0x24000, scoped, tag = 'input window, operand 2, single buffered']
    #allocation3 [shape = 's32[1]{0}', space=sflag, size = 0x4, scoped, tag = 'scoped memory for tpu_custom_call.1']
    #allocation4 [shape = 's32[1]{0}', space=sflag, size = 0x4, scoped, tag = 'scoped memory for tpu_custom_call.1']
    #allocation5 [shape = 'u8[8192]{0}', space=vmem, size = 0x2000, scoped, tag = 'output window, operand 0, single buffered']
    %8 = vsyncpa [#allocation3], 0
    %9 = vsyncpa [#allocation4], 0
    // Predicated region
    $region2: #{tpu_custom_call.1} parent=1 // pred_check
      _
    $region3: #{tpu_custom_call.1} parent=1 // pred_check_branch
      %11 = sbr.rel (0) target = $region5
    $region4: #{tpu_custom_call.1} parent=1 // pred_region
      _
    $region5: #{tpu_custom_call.1} parent=1 // pred_fallthru
      _
    // Predicated region
    $region6: #{tpu_custom_call.1} parent=1 // pred_check
      _
    $region7: #{tpu_custom_call.1} parent=1 // pred_check_branch
      %13 = sbr.rel (0) target = $region9
    $region8: #{tpu_custom_call.1} parent=1 // pred_region
      _
    $region9: #{tpu_custom_call.1} parent=1 // pred_fallthru
      _
    // Predicated region
    $region10: #{tpu_custom_call.1} parent=1 // pred_check
      _
    $region11: #{tpu_custom_call.1} parent=1 // pred_check_branch
      %15 = sbr.rel (0) target = $region13
    $region12: #{tpu_custom_call.1} parent=1 // pred_region
      %17 = vsyncadd [#allocation3], 0
      %s18 = sshll.u32 %s2, 4
      %s19 = int_to_ptr.hbm [resolvable:$true] %s18
      %s20 = sshll.u32 [#allocation2], 4
      %s21 = int_to_ptr.vmem [resolvable:$true] %s20
      %26 = dma.hbm_to_vmem [thread:$0]  %s19, 4608, %s21, [#allocation3], 128, 128, 8
    $region13: #{tpu_custom_call.1} parent=1 // pred_fallthru
      _
    // Predicated region
    $region14: #{tpu_custom_call.1} parent=1 // pred_check
      _
    $region15: #{tpu_custom_call.1} parent=1 // pred_check_branch
      %28 = sbr.rel (0) target = $region17
    $region16: #{tpu_custom_call.1} parent=1 // pred_region
      %30 = dma.done [#allocation3], 4608
    $region17: #{tpu_custom_call.1} parent=1 // pred_fallthru
      _
    %v31 = vld [vmem:[%s0] sm:$0xff]
    %v32 = vld [vmem:[%s0 + $0x8] sm:$0xff]
    %v33 = vld [vmem:[%s0 + $0x10] sm:$0xff]
    %v34 = vld [vmem:[%s0 + $0x18] sm:$0xff]
    %v35 = vld [vmem:[%s0 + $0x20] sm:$0xff]
    %v36 = vld [vmem:[%s0 + $0x28] sm:$0xff]
    %v37 = vld [vmem:[%s0 + $0x30] sm:$0xff]
    %v38 = vld [vmem:[%s0 + $0x38] sm:$0xff]
    %v39 = vld [vmem:[#allocation2 + $0x20] sm:$0x3]
    %v40 = vld [vmem:[#allocation2 + $0x28] sm:$0x1]
    %v41 = vperm.slane %v40, 0
    %vm42 = vcmask 15360
    %v44 = vsel %vm42, %v31, 0
    %v47 = vsel %vm42, %v32, 0
    %v50 = vsel %vm42, %v33, 0
    %v53 = vsel %vm42, %v34, 0
    %v56 = vsel %vm42, %v35, 0
    %v59 = vsel %vm42, %v36, 0
    %v62 = vsel %vm42, %v37, 0
    %v65 = vsel %vm42, %v38, 0
    %vm67 = vcmask 1041408
    %v69 = vsel %vm67, %v39, 0
    %71 = vmatpush.msra.mxu0 0.0
    %72 = vmatpush.msra.mxu0 0.0
    %73 = vmatpush.msra.mxu0 0.0
    %74 = vmatpush.msra.mxu0 0.0
    %75 = vmatpush.msra.mxu0 0.0
    %76 = vmatpush.msra.mxu0 0.0
    %77 = vmatpush.msra.mxu0 0.0
    %78 = vmatpush.msra.mxu0 0.0
    %79 = vmatpush.msra.mxu0 0.0
    %80 = vmatpush.msra.mxu0 0.0
    %81 = vmatpush.msra.mxu0 0.0
    %82 = vmatpush.msra.mxu0 0.0
    %83 = vmatpush.msra.mxu0 0.0
    %84 = vmatpush.msra.mxu0 0.0
    %85 = vmatpush.msra.mxu0 0.0
    %86 = vmatpush.msra.mxu0 %v69
    %87 = vmatmul.f32.gmra.mxu0 %v44
    %v88 = vpop.f32.mrf.mxu0
    %v89 = vadd.f32 %v41, %v88
    %90 = vmatmul.f32.gmra.mxu0 %v47
    %v91 = vpop.f32.mrf.mxu0
    %v92 = vadd.f32 %v41, %v91
    %93 = vmatmul.f32.gmra.mxu0 %v50
    %v94 = vpop.f32.mrf.mxu0
    %v95 = vadd.f32 %v41, %v94
    %96 = vmatmul.f32.gmra.mxu0 %v53
    %v97 = vpop.f32.mrf.mxu0
    %v98 = vadd.f32 %v41, %v97
    %99 = vmatmul.f32.gmra.mxu0 %v56
    %v100 = vpop.f32.mrf.mxu0
    %v101 = vadd.f32 %v41, %v100
    %102 = vmatmul.f32.gmra.mxu0 %v59
    %v103 = vpop.f32.mrf.mxu0
    %v104 = vadd.f32 %v41, %v103
    %105 = vmatmul.f32.gmra.mxu0 %v62
    %v106 = vpop.f32.mrf.mxu0
    %v107 = vadd.f32 %v41, %v106
    %108 = vmatmul.f32.gmra.mxu0 %v65
    %v109 = vpop.f32.mrf.mxu0
    %v110 = vadd.f32 %v41, %v109
    %111 = vdwg.mxu0
    %v112 = vld [vmem:[#allocation2] sm:$0xff]
    %v113 = vld [vmem:[#allocation2 + $0x8] sm:$0xff]
    %v114 = vld [vmem:[#allocation2 + $0x10] sm:$0xff]
    %v115 = vld [vmem:[#allocation2 + $0x18] sm:$0xff]
    %vm116 = vcmask 261120
    %v118 = vsel %vm116, 0.0, 0
    %120 = vmatpush.msra.mxu0 0.0
    %121 = vmatpush.msra.mxu0 0.0
    %122 = vmatpush.msra.mxu0 0.0
    %123 = vmatpush.msra.mxu0 0.0
    %124 = vmatpush.msra.mxu0 0.0
    %125 = vmatpush.msra.mxu0 0.0
    %126 = vmatpush.msra.mxu0 0.0
    %127 = vmatpush.msra.mxu0 0.0
    %128 = vmatpush.msra.mxu0 0.0
    %129 = vmatpush.msra.mxu0 0.0
    %130 = vmatpush.msra.mxu0 0.0
    %131 = vmatpush.msra.mxu0 0.0
    %132 = vmatpush.msra.mxu0 %v115
    %133 = vmatpush.msra.mxu0 %v114
    %134 = vmatpush.msra.mxu0 %v113
    %135 = vmatpush.msra.mxu0 %v112
    %136 = vmatmul.f32.gmra.mxu0 %v118
    %v137 = vpop.f32.mrf.mxu0
    %v138 = vadd.f32 0.0, %v137
    %139 = vdwg.mxu0
    %v140 = vadd.f32 %v89, %v138
    %v141 = vxor.u32 %v140, 2147483648
    %v142 = vmul.f32 %v141, 1.442695
    %v143 = vpow.pop %v142
    %v144 = vadd.f32 %v143, 1.0
    %v145 = vrcp.pop %v144
    %v146 = vmul.f32 %v144, %v145
    %v147 = vsub.f32 1.0, %v146
    %v148 = vmul.f32 %v145, %v147
    %v149 = vadd.f32 %v145, %v148
    %vm150 = vweird.f32 %v144
    %vm151 = vweird.f32 %v145
    %vm152 = vmor %vm150, %vm151
    %v153 = vsel %vm152, %v145, %v149
    %v154 = vand.u32 2147483647, %v144
    %vm155 = vcmp.eq.f32.partialorder %v154, 8.507059e+37
    %v156 = vand.u32 %v144, 2147483648
    %v157 = vor.u32 1.1754944e-38, %v156
    %v158 = vsel %vm155, %v157, %v153
    %v159 = vmul.f32 1.0, %v158
    %v160 = vtanh.pop %v140
    %v161 = vmul.f32 %v159, 0.0
    %163 = vrot.lane.b32.xlu0 %v160, 64
    %v164 = vpop.permute.xlu0 %163
    %v166 = vmul.f32 %v159, %v164
    %168 = vrot.lane.b32.xlu0 %v166, 32
    %v169 = vpop.permute.xlu0 %168
    %v171 = vadd.f32 %v161, %v169
    %v172 = vtanh.pop %v171
    %174 = vrot.lane.b32.xlu0 %v172, 64
    %v175 = vpop.permute.xlu0 %174
    %v177 = vmul.f32 %v159, %v175
    %179 = vrot.lane.b32.xlu0 %v177, 32
    %v180 = vpop.permute.xlu0 %179
    %v181 = vsel %vm116, %v180, 0
    %183 = vmatpush.msra.mxu0 0.0
    %184 = vmatpush.msra.mxu0 0.0
    %185 = vmatpush.msra.mxu0 0.0
    %186 = vmatpush.msra.mxu0 0.0
    %187 = vmatpush.msra.mxu0 0.0
    %188 = vmatpush.msra.mxu0 0.0
    %189 = vmatpush.msra.mxu0 0.0
    %190 = vmatpush.msra.mxu0 0.0
    %191 = vmatpush.msra.mxu0 0.0
    %192 = vmatpush.msra.mxu0 0.0
    %193 = vmatpush.msra.mxu0 0.0
    %194 = vmatpush.msra.mxu0 0.0
    %195 = vmatpush.msra.mxu0 %v115
    %196 = vmatpush.msra.mxu0 %v114
    %197 = vmatpush.msra.mxu0 %v113
    %198 = vmatpush.msra.mxu0 %v112
    %199 = vmatmul.f32.gmra.mxu0 %v181
    %v200 = vpop.f32.mrf.mxu0
    %v201 = vadd.f32 0.0, %v200
    %202 = vdwg.mxu0
    %v203 = vadd.f32 %v92, %v201
    %v204 = vxor.u32 %v203, 2147483648
    %v205 = vmul.f32 %v204, 1.442695
    %v206 = vpow.pop %v205
    %v207 = vadd.f32 %v206, 1.0
    %v208 = vrcp.pop %v207
    %v209 = vmul.f32 %v207, %v208
    %v210 = vsub.f32 1.0, %v209
    %v211 = vmul.f32 %v208, %v210
    %v212 = vadd.f32 %v208, %v211
    %vm213 = vweird.f32 %v207
    %vm214 = vweird.f32 %v208
    %vm215 = vmor %vm213, %vm214
    %v216 = vsel %vm215, %v208, %v212
    %v217 = vand.u32 2147483647, %v207
    %vm218 = vcmp.eq.f32.partialorder %v217, 8.507059e+37
    %v219 = vand.u32 %v207, 2147483648
    %v220 = vor.u32 1.1754944e-38, %v219
    %v221 = vsel %vm218, %v220, %v216
    %v222 = vmul.f32 1.0, %v221
    %v223 = vtanh.pop %v203
    %v224 = vmul.f32 %v222, %v171
    %226 = vrot.lane.b32.xlu0 %v223, 64
    %v227 = vpop.permute.xlu0 %226
    %v229 = vmul.f32 %v222, %v227
    %231 = vrot.lane.b32.xlu0 %v229, 32
    %v232 = vpop.permute.xlu0 %231
    %v234 = vadd.f32 %v224, %v232
    %v235 = vtanh.pop %v234
    %237 = vrot.lane.b32.xlu0 %v235, 64
    %v238 = vpop.permute.xlu0 %237
    %v240 = vmul.f32 %v222, %v238
    %242 = vrot.lane.b32.xlu0 %v240, 32
    %v243 = vpop.permute.xlu0 %242
    %v244 = vsel %vm116, %v243, 0
    %246 = vmatpush.msra.mxu0 0.0
    %247 = vmatpush.msra.mxu0 0.0
    %248 = vmatpush.msra.mxu0 0.0
    %249 = vmatpush.msra.mxu0 0.0
    %250 = vmatpush.msra.mxu0 0.0
    %251 = vmatpush.msra.mxu0 0.0
    %252 = vmatpush.msra.mxu0 0.0
    %253 = vmatpush.msra.mxu0 0.0
    %254 = vmatpush.msra.mxu0 0.0
    %255 = vmatpush.msra.mxu0 0.0
    %256 = vmatpush.msra.mxu0 0.0
    %257 = vmatpush.msra.mxu0 0.0
    %258 = vmatpush.msra.mxu0 %v115
    %259 = vmatpush.msra.mxu0 %v114
    %260 = vmatpush.msra.mxu0 %v113
    %261 = vmatpush.msra.mxu0 %v112
    %262 = vmatmul.f32.gmra.mxu0 %v244
    %v263 = vpop.f32.mrf.mxu0
    %v264 = vadd.f32 0.0, %v263
    %265 = vdwg.mxu0
    %v266 = vadd.f32 %v95, %v264
    %v267 = vxor.u32 %v266, 2147483648
    %v268 = vmul.f32 %v267, 1.442695
    %v269 = vpow.pop %v268
    %v270 = vadd.f32 %v269, 1.0
    %v271 = vrcp.pop %v270
    %v272 = vmul.f32 %v270, %v271
    %v273 = vsub.f32 1.0, %v272
    %v274 = vmul.f32 %v271, %v273
    %v275 = vadd.f32 %v271, %v274
    %vm276 = vweird.f32 %v270
    %vm277 = vweird.f32 %v271
    %vm278 = vmor %vm276, %vm277
    %v279 = vsel %vm278, %v271, %v275
    %v280 = vand.u32 2147483647, %v270
    %vm281 = vcmp.eq.f32.partialorder %v280, 8.507059e+37
    %v282 = vand.u32 %v270, 2147483648
    %v283 = vor.u32 1.1754944e-38, %v282
    %v284 = vsel %vm281, %v283, %v279
    %v285 = vmul.f32 1.0, %v284
    %v286 = vtanh.pop %v266
    %v287 = vmul.f32 %v285, %v234
    %289 = vrot.lane.b32.xlu0 %v286, 64
    %v290 = vpop.permute.xlu0 %289
    %v292 = vmul.f32 %v285, %v290
    %294 = vrot.lane.b32.xlu0 %v292, 32
    %v295 = vpop.permute.xlu0 %294
    %v297 = vadd.f32 %v287, %v295
    %v298 = vtanh.pop %v297
    %300 = vrot.lane.b32.xlu0 %v298, 64
    %v301 = vpop.permute.xlu0 %300
    %v303 = vmul.f32 %v285, %v301
    %305 = vrot.lane.b32.xlu0 %v303, 32
    %v306 = vpop.permute.xlu0 %305
    %v307 = vsel %vm116, %v306, 0
    %309 = vmatpush.msra.mxu0 0.0
    %310 = vmatpush.msra.mxu0 0.0
    %311 = vmatpush.msra.mxu0 0.0
    %312 = vmatpush.msra.mxu0 0.0
    %313 = vmatpush.msra.mxu0 0.0
    %314 = vmatpush.msra.mxu0 0.0
    %315 = vmatpush.msra.mxu0 0.0
    %316 = vmatpush.msra.mxu0 0.0
    %317 = vmatpush.msra.mxu0 0.0
    %318 = vmatpush.msra.mxu0 0.0
    %319 = vmatpush.msra.mxu0 0.0
    %320 = vmatpush.msra.mxu0 0.0
    %321 = vmatpush.msra.mxu0 %v115
    %322 = vmatpush.msra.mxu0 %v114
    %323 = vmatpush.msra.mxu0 %v113
    %324 = vmatpush.msra.mxu0 %v112
    %325 = vmatmul.f32.gmra.mxu0 %v307
    %v326 = vpop.f32.mrf.mxu0
    %v327 = vadd.f32 0.0, %v326
    %328 = vdwg.mxu0
    %v329 = vadd.f32 %v98, %v327
    %v330 = vxor.u32 %v329, 2147483648
    %v331 = vmul.f32 %v330, 1.442695
    %v332 = vpow.pop %v331
    %v333 = vadd.f32 %v332, 1.0
    %v334 = vrcp.pop %v333
    %v335 = vmul.f32 %v333, %v334
    %v336 = vsub.f32 1.0, %v335
    %v337 = vmul.f32 %v334, %v336
    %v338 = vadd.f32 %v334, %v337
    %vm339 = vweird.f32 %v333
    %vm340 = vweird.f32 %v334
    %vm341 = vmor %vm339, %vm340
    %v342 = vsel %vm341, %v334, %v338
    %v343 = vand.u32 2147483647, %v333
    %vm344 = vcmp.eq.f32.partialorder %v343, 8.507059e+37
    %v345 = vand.u32 %v333, 2147483648
    %v346 = vor.u32 1.1754944e-38, %v345
    %v347 = vsel %vm344, %v346, %v342
    %v348 = vmul.f32 1.0, %v347
    %v349 = vtanh.pop %v329
    %v350 = vmul.f32 %v348, %v297
    %352 = vrot.lane.b32.xlu0 %v349, 64
    %v353 = vpop.permute.xlu0 %352
    %v355 = vmul.f32 %v348, %v353
    %357 = vrot.lane.b32.xlu0 %v355, 32
    %v358 = vpop.permute.xlu0 %357
    %v360 = vadd.f32 %v350, %v358
    %v361 = vtanh.pop %v360
    %363 = vrot.lane.b32.xlu0 %v361, 64
    %v364 = vpop.permute.xlu0 %363
    %v366 = vmul.f32 %v348, %v364
    %368 = vrot.lane.b32.xlu0 %v366, 32
    %v369 = vpop.permute.xlu0 %368
    %v370 = vsel %vm116, %v369, 0
    %372 = vmatpush.msra.mxu0 0.0
    %373 = vmatpush.msra.mxu0 0.0
    %374 = vmatpush.msra.mxu0 0.0
    %375 = vmatpush.msra.mxu0 0.0
    %376 = vmatpush.msra.mxu0 0.0
    %377 = vmatpush.msra.mxu0 0.0
    %378 = vmatpush.msra.mxu0 0.0
    %379 = vmatpush.msra.mxu0 0.0
    %380 = vmatpush.msra.mxu0 0.0
    %381 = vmatpush.msra.mxu0 0.0
    %382 = vmatpush.msra.mxu0 0.0
    %383 = vmatpush.msra.mxu0 0.0
    %384 = vmatpush.msra.mxu0 %v115
    %385 = vmatpush.msra.mxu0 %v114
    %386 = vmatpush.msra.mxu0 %v113
    %387 = vmatpush.msra.mxu0 %v112
    %388 = vmatmul.f32.gmra.mxu0 %v370
    %v389 = vpop.f32.mrf.mxu0
    %v390 = vadd.f32 0.0, %v389
    %391 = vdwg.mxu0
    %v392 = vadd.f32 %v101, %v390
    %v393 = vxor.u32 %v392, 2147483648
    %v394 = vmul.f32 %v393, 1.442695
    %v395 = vpow.pop %v394
    %v396 = vadd.f32 %v395, 1.0
    %v397 = vrcp.pop %v396
    %v398 = vmul.f32 %v396, %v397
    %v399 = vsub.f32 1.0, %v398
    %v400 = vmul.f32 %v397, %v399
    %v401 = vadd.f32 %v397, %v400
    %vm402 = vweird.f32 %v396
    %vm403 = vweird.f32 %v397
    %vm404 = vmor %vm402, %vm403
    %v405 = vsel %vm404, %v397, %v401
    %v406 = vand.u32 2147483647, %v396
    %vm407 = vcmp.eq.f32.partialorder %v406, 8.507059e+37
    %v408 = vand.u32 %v396, 2147483648
    %v409 = vor.u32 1.1754944e-38, %v408
    %v410 = vsel %vm407, %v409, %v405
    %v411 = vmul.f32 1.0, %v410
    %v412 = vtanh.pop %v392
    %v413 = vmul.f32 %v411, %v360
    %415 = vrot.lane.b32.xlu0 %v412, 64
    %v416 = vpop.permute.xlu0 %415
    %v418 = vmul.f32 %v411, %v416
    %420 = vrot.lane.b32.xlu0 %v418, 32
    %v421 = vpop.permute.xlu0 %420
    %v423 = vadd.f32 %v413, %v421
    %v424 = vtanh.pop %v423
    %426 = vrot.lane.b32.xlu0 %v424, 64
    %v427 = vpop.permute.xlu0 %426
    %v429 = vmul.f32 %v411, %v427
    %431 = vrot.lane.b32.xlu0 %v429, 32
    %v432 = vpop.permute.xlu0 %431
    %v433 = vsel %vm116, %v432, 0
    %435 = vmatpush.msra.mxu0 0.0
    %436 = vmatpush.msra.mxu0 0.0
    %437 = vmatpush.msra.mxu0 0.0
    %438 = vmatpush.msra.mxu0 0.0
    %439 = vmatpush.msra.mxu0 0.0
    %440 = vmatpush.msra.mxu0 0.0
    %441 = vmatpush.msra.mxu0 0.0
    %442 = vmatpush.msra.mxu0 0.0
    %443 = vmatpush.msra.mxu0 0.0
    %444 = vmatpush.msra.mxu0 0.0
    %445 = vmatpush.msra.mxu0 0.0
    %446 = vmatpush.msra.mxu0 0.0
    %447 = vmatpush.msra.mxu0 %v115
    %448 = vmatpush.msra.mxu0 %v114
    %449 = vmatpush.msra.mxu0 %v113
    %450 = vmatpush.msra.mxu0 %v112
    %451 = vmatmul.f32.gmra.mxu0 %v433
    %v452 = vpop.f32.mrf.mxu0
    %v453 = vadd.f32 0.0, %v452
    %454 = vdwg.mxu0
    %v455 = vadd.f32 %v104, %v453
    %v456 = vxor.u32 %v455, 2147483648
    %v457 = vmul.f32 %v456, 1.442695
    %v458 = vpow.pop %v457
    %v459 = vadd.f32 %v458, 1.0
    %v460 = vrcp.pop %v459
    %v461 = vmul.f32 %v459, %v460
    %v462 = vsub.f32 1.0, %v461
    %v463 = vmul.f32 %v460, %v462
    %v464 = vadd.f32 %v460, %v463
    %vm465 = vweird.f32 %v459
    %vm466 = vweird.f32 %v460
    %vm467 = vmor %vm465, %vm466
    %v468 = vsel %vm467, %v460, %v464
    %v469 = vand.u32 2147483647, %v459
    %vm470 = vcmp.eq.f32.partialorder %v469, 8.507059e+37
    %v471 = vand.u32 %v459, 2147483648
    %v472 = vor.u32 1.1754944e-38, %v471
    %v473 = vsel %vm470, %v472, %v468
    %v474 = vmul.f32 1.0, %v473
    %v475 = vtanh.pop %v455
    %v476 = vmul.f32 %v474, %v423
    %478 = vrot.lane.b32.xlu0 %v475, 64
    %v479 = vpop.permute.xlu0 %478
    %v481 = vmul.f32 %v474, %v479
    %483 = vrot.lane.b32.xlu0 %v481, 32
    %v484 = vpop.permute.xlu0 %483
    %v486 = vadd.f32 %v476, %v484
    %v487 = vtanh.pop %v486
    %489 = vrot.lane.b32.xlu0 %v487, 64
    %v490 = vpop.permute.xlu0 %489
    %v492 = vmul.f32 %v474, %v490
    %494 = vrot.lane.b32.xlu0 %v492, 32
    %v495 = vpop.permute.xlu0 %494
    %v496 = vsel %vm116, %v495, 0
    %498 = vmatpush.msra.mxu0 0.0
    %499 = vmatpush.msra.mxu0 0.0
    %500 = vmatpush.msra.mxu0 0.0
    %501 = vmatpush.msra.mxu0 0.0
    %502 = vmatpush.msra.mxu0 0.0
    %503 = vmatpush.msra.mxu0 0.0
    %504 = vmatpush.msra.mxu0 0.0
    %505 = vmatpush.msra.mxu0 0.0
    %506 = vmatpush.msra.mxu0 0.0
    %507 = vmatpush.msra.mxu0 0.0
    %508 = vmatpush.msra.mxu0 0.0
    %509 = vmatpush.msra.mxu0 0.0
    %510 = vmatpush.msra.mxu0 %v115
    %511 = vmatpush.msra.mxu0 %v114
    %512 = vmatpush.msra.mxu0 %v113
    %513 = vmatpush.msra.mxu0 %v112
    %514 = vmatmul.f32.gmra.mxu0 %v496
    %v515 = vpop.f32.mrf.mxu0
    %v516 = vadd.f32 0.0, %v515
    %517 = vdwg.mxu0
    %v518 = vadd.f32 %v107, %v516
    %v519 = vxor.u32 %v518, 2147483648
    %v520 = vmul.f32 %v519, 1.442695
    %v521 = vpow.pop %v520
    %v522 = vadd.f32 %v521, 1.0
    %v523 = vrcp.pop %v522
    %v524 = vmul.f32 %v522, %v523
    %v525 = vsub.f32 1.0, %v524
    %v526 = vmul.f32 %v523, %v525
    %v527 = vadd.f32 %v523, %v526
    %vm528 = vweird.f32 %v522
    %vm529 = vweird.f32 %v523
    %vm530 = vmor %vm528, %vm529
    %v531 = vsel %vm530, %v523, %v527
    %v532 = vand.u32 2147483647, %v522
    %vm533 = vcmp.eq.f32.partialorder %v532, 8.507059e+37
    %v534 = vand.u32 %v522, 2147483648
    %v535 = vor.u32 1.1754944e-38, %v534
    %v536 = vsel %vm533, %v535, %v531
    %v537 = vmul.f32 1.0, %v536
    %v538 = vtanh.pop %v518
    %v539 = vmul.f32 %v537, %v486
    %541 = vrot.lane.b32.xlu0 %v538, 64
    %v542 = vpop.permute.xlu0 %541
    %v544 = vmul.f32 %v537, %v542
    %546 = vrot.lane.b32.xlu0 %v544, 32
    %v547 = vpop.permute.xlu0 %546
    %v549 = vadd.f32 %v539, %v547
    %v550 = vtanh.pop %v549
    %552 = vrot.lane.b32.xlu0 %v550, 64
    %v553 = vpop.permute.xlu0 %552
    %v555 = vmul.f32 %v537, %v553
    %557 = vrot.lane.b32.xlu0 %v555, 32
    %v558 = vpop.permute.xlu0 %557
    %v559 = vsel %vm116, %v558, 0
    %561 = vmatpush.msra.mxu0 0.0
    %562 = vmatpush.msra.mxu0 0.0
    %563 = vmatpush.msra.mxu0 0.0
    %564 = vmatpush.msra.mxu0 0.0
    %565 = vmatpush.msra.mxu0 0.0
    %566 = vmatpush.msra.mxu0 0.0
    %567 = vmatpush.msra.mxu0 0.0
    %568 = vmatpush.msra.mxu0 0.0
    %569 = vmatpush.msra.mxu0 0.0
    %570 = vmatpush.msra.mxu0 0.0
    %571 = vmatpush.msra.mxu0 0.0
    %572 = vmatpush.msra.mxu0 0.0
    %573 = vmatpush.msra.mxu0 %v115
    %574 = vmatpush.msra.mxu0 %v114
    %575 = vmatpush.msra.mxu0 %v113
    %576 = vmatpush.msra.mxu0 %v112
    %577 = vmatmul.f32.gmra.mxu0 %v559
    %v578 = vpop.f32.mrf.mxu0
    %v579 = vadd.f32 0.0, %v578
    %580 = vdwg.mxu0
    %v581 = vadd.f32 %v110, %v579
    %v582 = vxor.u32 %v581, 2147483648
    %v583 = vmul.f32 %v582, 1.442695
    %v584 = vpow.pop %v583
    %v585 = vadd.f32 %v584, 1.0
    %v586 = vrcp.pop %v585
    %v587 = vmul.f32 %v585, %v586
    %v588 = vsub.f32 1.0, %v587
    %v589 = vmul.f32 %v586, %v588
    %v590 = vadd.f32 %v586, %v589
    %vm591 = vweird.f32 %v585
    %vm592 = vweird.f32 %v586
    %vm593 = vmor %vm591, %vm592
    %v594 = vsel %vm593, %v586, %v590
    %v595 = vand.u32 2147483647, %v585
    %vm596 = vcmp.eq.f32.partialorder %v595, 8.507059e+37
    %v597 = vand.u32 %v585, 2147483648
    %v598 = vor.u32 1.1754944e-38, %v597
    %v599 = vsel %vm596, %v598, %v594
    %v600 = vmul.f32 1.0, %v599
    %v601 = vtanh.pop %v581
    %v602 = vmul.f32 %v600, %v549
    %604 = vrot.lane.b32.xlu0 %v601, 64
    %v605 = vpop.permute.xlu0 %604
    %v607 = vmul.f32 %v600, %v605
    %609 = vrot.lane.b32.xlu0 %v607, 32
    %v610 = vpop.permute.xlu0 %609
    %v612 = vadd.f32 %v602, %v610
    %v613 = vtanh.pop %v612
    %615 = vrot.lane.b32.xlu0 %v613, 64
    %v616 = vpop.permute.xlu0 %615
    %v618 = vmul.f32 %v600, %v616
    %v619 = vld [vmem:[#allocation2 + $0x30] sm:$0xff]
    %v620 = vld [vmem:[#allocation2 + $0x38] sm:$0xff]
    %v621 = vld [vmem:[#allocation2 + $0x40] sm:$0xff]
    %v622 = vld [vmem:[#allocation2 + $0x48] sm:$0xff]
    %v623 = vld [vmem:[#allocation2 + $0x50] sm:$0x1]
    %v624 = vperm.slane %v623, 0
    %626 = vrot.lane.b32.xlu0 %v618, 32
    %v627 = vpop.permute.xlu0 %626
    %v628 = vsel %vm116, %v627, 0
    %630 = vmatpush.msra.mxu0 0.0
    %631 = vmatpush.msra.mxu0 0.0
    %632 = vmatpush.msra.mxu0 0.0
    %633 = vmatpush.msra.mxu0 0.0
    %634 = vmatpush.msra.mxu0 0.0
    %635 = vmatpush.msra.mxu0 0.0
    %636 = vmatpush.msra.mxu0 0.0
    %637 = vmatpush.msra.mxu0 0.0
    %638 = vmatpush.msra.mxu0 0.0
    %639 = vmatpush.msra.mxu0 0.0
    %640 = vmatpush.msra.mxu0 0.0
    %641 = vmatpush.msra.mxu0 0.0
    %642 = vmatpush.msra.mxu0 %v622
    %643 = vmatpush.msra.mxu0 %v621
    %644 = vmatpush.msra.mxu0 %v620
    %645 = vmatpush.msra.mxu0 %v619
    %646 = vmatmul.f32.gmra.mxu0 %v628
    %v647 = vpop.f32.mrf.mxu0
    %v648 = vadd.f32 %v624, %v647
    %649 = vdwg.mxu0
    %vm650 = vcmp.ge.f32.partialorder %v648, 0.0
    %v651 = vmul.f32 %v648, 0.2
    %v652 = vsel %vm650, %v648, %v651
    %v653 = vld [vmem:[#allocation2 + $0x58] sm:$0xff]
    %v654 = vld [vmem:[#allocation2 + $0x60] sm:$0xff]
    %v655 = vld [vmem:[#allocation2 + $0x68] sm:$0x1]
    %v656 = vperm.slane %v655, 0
    %vm657 = vcmask 130048
    %v659 = vsel %vm657, %v652, 0
    %661 = vmatpush.msra.mxu0 0.0
    %662 = vmatpush.msra.mxu0 0.0
    %663 = vmatpush.msra.mxu0 0.0
    %664 = vmatpush.msra.mxu0 0.0
    %665 = vmatpush.msra.mxu0 0.0
    %666 = vmatpush.msra.mxu0 0.0
    %667 = vmatpush.msra.mxu0 0.0
    %668 = vmatpush.msra.mxu0 0.0
    %669 = vmatpush.msra.mxu0 0.0
    %670 = vmatpush.msra.mxu0 0.0
    %671 = vmatpush.msra.mxu0 0.0
    %672 = vmatpush.msra.mxu0 0.0
    %673 = vmatpush.msra.mxu0 0.0
    %674 = vmatpush.msra.mxu0 0.0
    %675 = vmatpush.msra.mxu0 %v654
    %676 = vmatpush.msra.mxu0 %v653
    %677 = vmatmul.f32.gmra.mxu0 %v659
    %v678 = vpop.f32.mrf.mxu0
    %v679 = vadd.f32 %v656, %v678
    %680 = vdwg.mxu0
    %v681 = vld [vmem:[%s1] sm:$0xff]
    %v682 = vld [vmem:[%s1 + $0x8] sm:$0xff]
    %v683 = vld [vmem:[#allocation2 + $0x70] sm:$0xff]
    %v684 = vld [vmem:[#allocation2 + $0x78] sm:$0xff]
    %v685 = vld [vmem:[#allocation2 + $0x80] sm:$0x1]
    %v686 = vperm.slane %v685, 0
    %v688 = vsel %vm657, %v681, 0
    %v691 = vsel %vm657, %v682, 0
    %693 = vmatpush.msra.mxu0 0.0
    %694 = vmatpush.msra.mxu0 0.0
    %695 = vmatpush.msra.mxu0 0.0
    %696 = vmatpush.msra.mxu0 0.0
    %697 = vmatpush.msra.mxu0 0.0
    %698 = vmatpush.msra.mxu0 0.0
    %699 = vmatpush.msra.mxu0 0.0
    %700 = vmatpush.msra.mxu0 0.0
    %701 = vmatpush.msra.mxu0 0.0
    %702 = vmatpush.msra.mxu0 0.0
    %703 = vmatpush.msra.mxu0 0.0
    %704 = vmatpush.msra.mxu0 0.0
    %705 = vmatpush.msra.mxu0 0.0
    %706 = vmatpush.msra.mxu0 0.0
    %707 = vmatpush.msra.mxu0 %v684
    %708 = vmatpush.msra.mxu0 %v683
    %709 = vmatmul.f32.gmra.mxu0 %v688
    %v710 = vpop.f32.mrf.mxu0
    %v711 = vadd.f32 %v686, %v710
    %712 = vmatmul.f32.gmra.mxu0 %v691
    %v713 = vpop.f32.mrf.mxu0
    %v714 = vadd.f32 %v686, %v713
    %715 = vdwg.mxu0
    %vm716 = vcmp.ge.f32.partialorder %v711, 0.0
    %vm717 = vcmp.ge.f32.partialorder %v714, 0.0
    %v718 = vmul.f32 %v711, 0.2
    %v719 = vmul.f32 %v714, 0.2
    %v720 = vsel %vm716, %v711, %v718
    %v721 = vsel %vm717, %v714, %v719
    %v722 = vld [vmem:[#allocation2 + $0x88] sm:$0xff]
    %v723 = vld [vmem:[#allocation2 + $0x90] sm:$0xff]
    %v724 = vld [vmem:[#allocation2 + $0x98] sm:$0xff]
    %v725 = vld [vmem:[#allocation2 + $0xa0] sm:$0xff]
    %v726 = vld [vmem:[#allocation2 + $0xa8] sm:$0x1]
    %v727 = vperm.slane %v726, 0
    %v729 = vsel %vm116, %v720, 0
    %v732 = vsel %vm116, %v721, 0
    %734 = vmatpush.msra.mxu0 0.0
    %735 = vmatpush.msra.mxu0 0.0
    %736 = vmatpush.msra.mxu0 0.0
    %737 = vmatpush.msra.mxu0 0.0
    %738 = vmatpush.msra.mxu0 0.0
    %739 = vmatpush.msra.mxu0 0.0
    %740 = vmatpush.msra.mxu0 0.0
    %741 = vmatpush.msra.mxu0 0.0
    %742 = vmatpush.msra.mxu0 0.0
    %743 = vmatpush.msra.mxu0 0.0
    %744 = vmatpush.msra.mxu0 0.0
    %745 = vmatpush.msra.mxu0 0.0
    %746 = vmatpush.msra.mxu0 %v725
    %747 = vmatpush.msra.mxu0 %v724
    %748 = vmatpush.msra.mxu0 %v723
    %749 = vmatpush.msra.mxu0 %v722
    %750 = vmatmul.f32.gmra.mxu0 %v729
    %v751 = vpop.f32.mrf.mxu0
    %v752 = vadd.f32 %v727, %v751
    %753 = vmatmul.f32.gmra.mxu0 %v732
    %v754 = vpop.f32.mrf.mxu0
    %v755 = vadd.f32 %v727, %v754
    %756 = vdwg.mxu0
    %v757 = vld [vmem:[#allocation2 + $0xb0] sm:$0xff]
    %v758 = vld [vmem:[#allocation2 + $0xb8] sm:$0xff]
    %v759 = vld [vmem:[#allocation2 + $0xc0] sm:$0xff]
    %v760 = vld [vmem:[#allocation2 + $0xc8] sm:$0xff]
    %v762 = vsel %vm657, %v752, 0
    %v765 = vsel %vm657, %v755, 0
    %767 = vmatpush.msra.mxu0 0.0
    %768 = vmatpush.msra.mxu0 0.0
    %769 = vmatpush.msra.mxu0 0.0
    %770 = vmatpush.msra.mxu0 0.0
    %771 = vmatpush.msra.mxu0 0.0
    %772 = vmatpush.msra.mxu0 0.0
    %773 = vmatpush.msra.mxu0 0.0
    %774 = vmatpush.msra.mxu0 0.0
    %775 = vmatpush.msra.mxu0 0.0
    %776 = vmatpush.msra.mxu0 0.0
    %777 = vmatpush.msra.mxu0 0.0
    %778 = vmatpush.msra.mxu0 0.0
    %779 = vmatpush.msra.mxu0 0.0
    %780 = vmatpush.msra.mxu0 0.0
    %781 = vmatpush.msra.mxu0 %v760
    %782 = vmatpush.msra.mxu0 %v759
    %783 = vmatmul.f32.gmra.mxu0 %v762
    %v784 = vpop.f32.mrf.mxu0
    %v785 = vadd.f32 0.0, %v784
    %786 = vmatmul.f32.gmra.mxu0 %v765
    %v787 = vpop.f32.mrf.mxu0
    %v788 = vadd.f32 0.0, %v787
    %789 = vdwg.mxu0
    %v791 = vsel %vm657, %v679, 0
    %793 = vmatpush.msra.mxu0 0.0
    %794 = vmatpush.msra.mxu0 0.0
    %795 = vmatpush.msra.mxu0 0.0
    %796 = vmatpush.msra.mxu0 0.0
    %797 = vmatpush.msra.mxu0 0.0
    %798 = vmatpush.msra.mxu0 0.0
    %799 = vmatpush.msra.mxu0 0.0
    %800 = vmatpush.msra.mxu0 0.0
    %801 = vmatpush.msra.mxu0 0.0
    %802 = vmatpush.msra.mxu0 0.0
    %803 = vmatpush.msra.mxu0 0.0
    %804 = vmatpush.msra.mxu0 0.0
    %805 = vmatpush.msra.mxu0 0.0
    %806 = vmatpush.msra.mxu0 0.0
    %807 = vmatpush.msra.mxu0 %v758
    %808 = vmatpush.msra.mxu0 %v757
    %809 = vmatmul.f32.gmra.mxu0 %v791
    %v810 = vpop.f32.mrf.mxu0
    %v811 = vadd.f32 %v785, %v810
    %812 = vmatmul.f32.gmra.mxu0 %v791
    %v813 = vpop.f32.mrf.mxu0
    %v814 = vadd.f32 %v788, %v813
    %815 = vdwg.mxu0
    %v816 = vld [vmem:[#allocation2 + $0xd0] sm:$0x1]
    %v817 = vperm.slane %v816, 0
    %v818 = vadd.f32 %v811, %v817
    %v819 = vadd.f32 %v814, %v817
    %vm820 = vcmp.ge.f32.partialorder %v818, 0.0
    %vm821 = vcmp.ge.f32.partialorder %v819, 0.0
    %v822 = vmul.f32 %v818, 0.2
    %v823 = vmul.f32 %v819, 0.2
    %v824 = vsel %vm820, %v818, %v822
    %v825 = vsel %vm821, %v819, %v823
    %v826 = vld [vmem:[#allocation2 + $0xd8] sm:$0xff]
    %v827 = vld [vmem:[#allocation2 + $0xe0] sm:$0xff]
    %v828 = vld [vmem:[#allocation2 + $0xe8] sm:$0xff]
    %v829 = vld [vmem:[#allocation2 + $0xf0] sm:$0xff]
    %v830 = vld [vmem:[#allocation2 + $0xf8] sm:$0xff]
    %v831 = vld [vmem:[#allocation2 + $0x100] sm:$0xff]
    %v832 = vld [vmem:[#allocation2 + $0x108] sm:$0xff]
    %v833 = vld [vmem:[#allocation2 + $0x110] sm:$0xff]
    %v834 = vld [vmem:[#allocation2 + $0x118] sm:$0x1]
    %v835 = vperm.slane %v834, 0
    %vm836 = vcmask 523264
    %v838 = vsel %vm836, %v824, 0
    %v841 = vsel %vm836, %v825, 0
    %843 = vmatpush.msra.mxu0 0.0
    %844 = vmatpush.msra.mxu0 0.0
    %845 = vmatpush.msra.mxu0 0.0
    %846 = vmatpush.msra.mxu0 0.0
    %847 = vmatpush.msra.mxu0 0.0
    %848 = vmatpush.msra.mxu0 0.0
    %849 = vmatpush.msra.mxu0 0.0
    %850 = vmatpush.msra.mxu0 0.0
    %851 = vmatpush.msra.mxu0 %v833
    %852 = vmatpush.msra.mxu0 %v832
    %853 = vmatpush.msra.mxu0 %v831
    %854 = vmatpush.msra.mxu0 %v830
    %855 = vmatpush.msra.mxu0 %v829
    %856 = vmatpush.msra.mxu0 %v828
    %857 = vmatpush.msra.mxu0 %v827
    %858 = vmatpush.msra.mxu0 %v826
    %859 = vmatmul.f32.gmra.mxu0 %v838
    %v860 = vpop.f32.mrf.mxu0
    %v861 = vadd.f32 %v835, %v860
    %862 = vmatmul.f32.gmra.mxu0 %v841
    %v863 = vpop.f32.mrf.mxu0
    %v864 = vadd.f32 %v835, %v863
    %865 = vdwg.mxu0
    %v866 = vxor.u32 %v861, 2147483648
    %v867 = vxor.u32 %v864, 2147483648
    %v868 = vmul.f32 %v866, 1.442695
    %v869 = vpow.pop %v868
    %v870 = vmul.f32 %v867, 1.442695
    %v871 = vpow.pop %v870
    %v872 = vadd.f32 %v869, 1.0
    %v873 = vadd.f32 %v871, 1.0
    %v874 = vrcp.pop %v872
    %v875 = vmul.f32 %v872, %v874
    %v876 = vsub.f32 1.0, %v875
    %v877 = vmul.f32 %v874, %v876
    %v878 = vadd.f32 %v874, %v877
    %vm879 = vweird.f32 %v872
    %vm880 = vweird.f32 %v874
    %vm881 = vmor %vm879, %vm880
    %v882 = vsel %vm881, %v874, %v878
    %v883 = vand.u32 2147483647, %v872
    %vm884 = vcmp.eq.f32.partialorder %v883, 8.507059e+37
    %v885 = vand.u32 %v872, 2147483648
    %v886 = vor.u32 1.1754944e-38, %v885
    %v887 = vsel %vm884, %v886, %v882
    %v888 = vmul.f32 1.0, %v887
    %v889 = vrcp.pop %v873
    %v890 = vmul.f32 %v873, %v889
    %v891 = vsub.f32 1.0, %v890
    %v892 = vmul.f32 %v889, %v891
    %v893 = vadd.f32 %v889, %v892
    %vm894 = vweird.f32 %v873
    %vm895 = vweird.f32 %v889
    %vm896 = vmor %vm894, %vm895
    %v897 = vsel %vm896, %v889, %v893
    %v898 = vand.u32 2147483647, %v873
    %vm899 = vcmp.eq.f32.partialorder %v898, 8.507059e+37
    %v900 = vand.u32 %v873, 2147483648
    %v901 = vor.u32 1.1754944e-38, %v900
    %v902 = vsel %vm899, %v901, %v897
    %v903 = vmul.f32 1.0, %v902
    %v904 = vmul.f32 %v888, 0.9999998
    %v905 = vmul.f32 %v903, 0.9999998
    %v906 = vadd.f32 %v904, 1e-07
    %v907 = vadd.f32 %v905, 1e-07
    %910 = vrot.lane.b32.xlu0 %v906, 123
    %v911 = vpop.permute.xlu0 %910
    %912 = vrot.lane.b32.xlu0 %v907, 123
    %v913 = vpop.permute.xlu0 %912
    %vm916 = vcmask 23552
    %v917 = vsel %vm916, %v911, 0.0
    %918 = vadd.xlane.f32.xlu0 %v917
    %v919 = vpop.xlane.xlu0 %918
    %v920 = vsel %vm916, %v913, 0.0
    %921 = vadd.xlane.f32.xlu0 %v920
    %v922 = vpop.xlane.xlu0 %921
    %v923 = vrcp.pop 3.0
    %v924 = vmul.f32 3.0, %v923
    %v925 = vsub.f32 1.0, %v924
    %v926 = vmul.f32 %v923, %v925
    %v927 = vadd.f32 %v923, %v926
    %vm928 = vweird.f32 %v923
    %v929 = vsel %vm928, %v923, %v927
    %v930 = vmul.f32 %v919, %v929
    %v931 = vmul.f32 %v922, %v929
    %v932 = vlaneseq
    %v933 = vand.u32 %v932, 127
    %vm934 = vcmp.eq.s32.totalorder %v933, 0
    %v935 = vsel %vm934, %v930, %v861
    %v936 = vsel %vm934, %v931, %v864
    %937 = vst [vmem:[#allocation5] sm:$0xff] %v935
    %938 = vst [vmem:[#allocation5 + $0x8] sm:$0xff] %v936
    // Predicated region
    $region18: #{tpu_custom_call.1} parent=1 // pred_check
      _
    $region19: #{tpu_custom_call.1} parent=1 // pred_check_branch
      %940 = sbr.rel (0) target = $region21
    $region20: #{tpu_custom_call.1} parent=1 // pred_region
      %942 = vsyncadd [#allocation4], 0
      %s943 = sshll.u32 [#allocation5], 4
      %s944 = int_to_ptr.vmem [resolvable:$true] %s943
      %s945 = sshll.u32 %s3, 4
      %s946 = int_to_ptr.hbm [resolvable:$true] %s945
      %951 = dma.vmem_to_hbm [thread:$0]  %s944, 256, %s946, [#allocation4], 128, 128, 8
    $region21: #{tpu_custom_call.1} parent=1 // pred_fallthru
      _
    // Predicated region
    $region22: #{tpu_custom_call.1} parent=1 // pred_check
      _
    $region23: #{tpu_custom_call.1} parent=1 // pred_check_branch
      %953 = sbr.rel (0) target = $region25
    $region24: #{tpu_custom_call.1} parent=1 // pred_region
      %955 = dma.done [#allocation4], 256
    $region25: #{tpu_custom_call.1} parent=1 // pred_fallthru
      _
    %956 = vsyncpa [#allocation3], 1
    %957 = vsyncpa [#allocation4], 1

</llo_original>
